<compile_context>
chip_gen: v5e
topology: v5e:2x2
jax: 0.10.0
libtpu: 0.0.40
codegen_flags: <defaults>
</compile_context>

<pallas_src>
import math
import jax
import jax.numpy as jnp
from jax.experimental import pallas as pl
from jax.experimental.pallas import tpu as pltpu

# ---- small, module-consistent dimensions -----------------------------------
EMBED_DIM = 32      # embedding_dim
HIDDEN_DIM = 64     # hidden_dim (hdim, value/gate dim)
FFN_DIM = 64        # ffn_hidden_dim
Z_DIM = 16          # z_dim (shared q/k dim)
N_DIM = 4           # n_dim (EMA dims per channel)
SEQ_LEN = 8
BATCH = 2
MAX_POS = SEQ_LEN   # max_positions (>= SEQ_LEN)
LN_EPS = 1e-5
SCALING = Z_DIM ** -0.5
MX_OUT = EMBED_DIM + Z_DIM + HIDDEN_DIM + EMBED_DIM   # u | z | r | hx = 144
assert FFN_DIM == HIDDEN_DIM  # required by the wh|w2 lane-packing below

# rows of the packed (16, MX_OUT) f32 small-parameter slab
ROW_LN1_W, ROW_LN1_B, ROW_OMEGA = 0, 1, 2
ROW_BV, ROW_BM = 3, 4
ROW_QG0, ROW_QG1, ROW_QB0, ROW_QB1 = 5, 6, 7, 8
ROW_BH, ROW_LN2_W, ROW_LN2_B, ROW_B1, ROW_B2 = 9, 10, 11, 12, 13
PACK_ROWS = 16


# ---- in-kernel helpers ------------------------------------------------------
def _sigmoid(v):
    return 1.0 / (1.0 + jnp.exp(-v))


def _silu(v):
    return v * _sigmoid(v)


def _layer_norm(v, w, b):
    mu = jnp.mean(v, axis=-1, keepdims=True)
    var = jnp.mean((v - mu) ** 2, axis=-1, keepdims=True)
    return (v - mu) * jax.lax.rsqrt(var + LN_EPS) * w + b


def _bf16(v):
    return v.astype(jnp.bfloat16)


# ---- the fused Pallas kernel (single invocation, whole batch) ---------------
def _mega_kernel(x_ref, pk_ref, ema_w_ref, relbias_ref, wd_ref, whw2_ref,
                 out_ref, attn_ref):
    B, L, D = x_ref.shape
    Z, H, F = Z_DIM, HIDDEN_DIM, FFN_DIM
    BL = B * L

    # -- unpack the small-parameter slab (static slices, all (1, n) rows) --
    pk = pk_ref[...]                                        # (16, 144) f32
    ln1_w = pk[ROW_LN1_W:ROW_LN1_W + 1, :D]
    ln1_b = pk[ROW_LN1_B:ROW_LN1_B + 1, :D]
    omega = pk[ROW_OMEGA:ROW_OMEGA + 1, :D]
    bv = pk[ROW_BV:ROW_BV + 1, :H]
    bm = pk[ROW_BM:ROW_BM + 1, :MX_OUT]
    qg0 = pk[ROW_QG0:ROW_QG0 + 1, :Z]
    qg1 = pk[ROW_QG1:ROW_QG1 + 1, :Z]
    qb0 = pk[ROW_QB0:ROW_QB0 + 1, :Z]
    qb1 = pk[ROW_QB1:ROW_QB1 + 1, :Z]
    bh = pk[ROW_BH:ROW_BH + 1, :D]
    ln2_w = pk[ROW_LN2_W:ROW_LN2_W + 1, :D]
    ln2_b = pk[ROW_LN2_B:ROW_LN2_B + 1, :D]
    b1 = pk[ROW_B1:ROW_B1 + 1, :F]
    b2 = pk[ROW_B2:ROW_B2 + 1, :D]

    # -- unpack weight slabs (static lane slices, bf16) --
    wd = wd_ref[...]                                        # (D, H+MX_OUT+F) bf16
    wv = wd[:, :H]
    wm = wd[:, H:H + MX_OUT]
    w1 = wd[:, H + MX_OUT:]
    whw2 = whw2_ref[...]                                    # (H, 2*D) bf16
    wh = whw2[:, :D]
    w2 = whw2[:, D:]

    x = x_ref[...].reshape(BL, D)                           # flatten batch into rows
    residual = x

    # ---- MovingAverageGatedAttention (prenorm) ----
    xn = _layer_norm(x, ln1_w, ln1_b)                       # (BL, D) f32
    xn_bf = _bf16(xn)                                       # single bf16 cast of xn

    # value projection (MXU: bf16 operands, f32 accumulate)
    v = _silu(jnp.dot(xn_bf, wv, preferred_element_type=jnp.float32) + bv)   # (BL, H)

    # bidirectional multi-head EMA as a direct VPU broadcast-multiply + sublane reduce:
    #   ema[b, t, d] = sum_s W[t, s, d] * xn[b, s, d]
    xn3 = xn.reshape(B, L, D)
    ema = jnp.sum(ema_w_ref[...][None, :, :, :] * xn3[:, None, :, :], axis=2)  # (B,L,D)
    mx = _silu(ema.reshape(BL, D) + xn * omega)             # (BL, D)

    # fused mx_proj: single (BL, D) @ (D, D+Z+H+D) MXU pass, static lane slices
    base = jnp.dot(_bf16(mx), wm, preferred_element_type=jnp.float32) + bm    # (BL, 144)
    u = _sigmoid(base[:, :D])                               # (BL, D)
    zr = _silu(base[:, D:D + Z + H])                        # (BL, Z+H)
    z = zr[:, :Z]                                           # (BL, Z)
    r = zr[:, Z:]                                           # (BL, H)
    hx = base[:, D + Z + H:]                                # (BL, D)

    q = _bf16((z * qg0 + qb0) * SCALING)                    # (BL, Z)
    k = _bf16(z * qg1 + qb1)                                # (BL, Z)

    # per-batch softmax attention with simple relative positional bias (batched MXU)
    qk = jnp.einsum('blz,bmz->blm', q.reshape(B, L, Z), k.reshape(B, L, Z),
                    preferred_element_type=jnp.float32)     # (B, L, L)
    qk = qk + relbias_ref[...][None, :, :]
    qk_max = jnp.max(qk, axis=-1, keepdims=True)
    p = jnp.exp(qk - qk_max)
    attn = p * pl.reciprocal(jnp.sum(p, axis=-1, keepdims=True))   # exact f32 softmax

    h3 = jnp.einsum('blm,bmh->blh', _bf16(attn), _bf16(v.reshape(B, L, H)),
                    preferred_element_type=jnp.float32)     # (B, L, H)
    h = _silu(hx + jnp.dot(_bf16(h3.reshape(BL, H) * r), wh,
                           preferred_element_type=jnp.float32) + bh)          # (BL, D)
    mega_out = residual + u * (h - residual)                # addcmul gating

    # ---- NormalizedFeedForwardNetwork (prenorm) ----
    y = _layer_norm(mega_out, ln2_w, ln2_b)
    y = _silu(jnp.dot(_bf16(y), w1, preferred_element_type=jnp.float32) + b1)
    y = jnp.dot(_bf16(y), w2, preferred_element_type=jnp.float32) + b2
    out = y + mega_out

    out_ref[...] = out.reshape(B, L, D)
    attn_ref[...] = attn


# ---- plain-JAX glue: EMA Toeplitz kernel + relative position bias -----------
def _build_ema_matrix(delta, alpha, beta, gamma, L):
    # delta/alpha/beta/gamma: (2D, N); returns W of shape (Lt, Ls, D) with
    # W[t, s, d] the bidirectional per-channel Toeplitz EMA tap (kept f32).
    p = jax.nn.sigmoid(delta)
    a = jax.nn.sigmoid(alpha)
    q = 1.0 - p * a
    vander = jnp.arange(L, dtype=jnp.float32)[None, None, :] * jnp.log(q)[:, :, None]
    kern = (p * beta)[:, :, None] * jnp.exp(vander)                # (2D, N, L)
    scale = math.sqrt(1.0 / N_DIM)
    k = jnp.einsum('dnl,dn->dl', kern, gamma * scale)              # (2D, L)
    k1, k2 = k[:EMBED_DIM], k[EMBED_DIM:]                          # (D, L) each
    t = jnp.arange(L)[:, None]
    s = jnp.arange(L)[None, :]
    d_fwd = t - s
    d_bwd = s - t
    w_fwd = jnp.where(d_fwd >= 0, k1[:, jnp.clip(d_fwd, 0, L - 1)], 0.0)
    w_bwd = jnp.where(d_bwd >= 0, k2[:, jnp.clip(d_bwd, 0, L - 1)], 0.0)
    w = w_fwd + w_bwd                                              # (D, Lt, Ls)
    return jnp.transpose(w, (1, 2, 0)).astype(jnp.float32)         # (Lt, Ls, D)


def _build_rel_bias(rel_pos, L):
    # SimpleRelativePositionalBias: bias[i, j] = rel_pos[MAX_POS - 1 + (j - i)]
    t = jnp.arange(L)[:, None]
    s = jnp.arange(L)[None, :]
    return rel_pos[MAX_POS - 1 + s - t].astype(jnp.float32)        # (L, L)


def _pack_small_params(params):
    # pack the 12 tiny bias/scale vectors into one (16, MX_OUT) f32 slab
    pk = jnp.zeros((PACK_ROWS, MX_OUT), jnp.float32)

    def put(buf, row, vec):
        vec = jnp.asarray(vec, jnp.float32).reshape(-1)
        return buf.at[row, :vec.shape[0]].set(vec)

    pk = put(pk, ROW_LN1_W, params['ln1_w'])
    pk = put(pk, ROW_LN1_B, params['ln1_b'])
    pk = put(pk, ROW_OMEGA, params['omega'])
    pk = put(pk, ROW_BV, params['bv'])
    pk = put(pk, ROW_BM, params['bm'])
    pk = put(pk, ROW_QG0, params['qk_gamma'][0])
    pk = put(pk, ROW_QG1, params['qk_gamma'][1])
    pk = put(pk, ROW_QB0, params['qk_beta'][0])
    pk = put(pk, ROW_QB1, params['qk_beta'][1])
    pk = put(pk, ROW_BH, params['bh'])
    pk = put(pk, ROW_LN2_W, params['ln2_w'])
    pk = put(pk, ROW_LN2_B, params['ln2_b'])
    pk = put(pk, ROW_B1, params['b1'])
    pk = put(pk, ROW_B2, params['b2'])
    return pk


# ---- parameters (deterministic synthetic init) ------------------------------
def init_params(key):
    D, H, Z, F, N = EMBED_DIM, HIDDEN_DIM, Z_DIM, FFN_DIM, N_DIM
    keys = jax.random.split(key, 24)

    def nrm(k, shape, scale=0.02):
        return (scale * jax.random.normal(k, shape)).astype(jnp.float32)

    return dict(
        ln1_w=1.0 + nrm(keys[0], (1, D), 0.1), ln1_b=nrm(keys[1], (1, D), 0.1),
        ema_delta=nrm(keys[2], (2 * D, N), 1.0), ema_alpha=nrm(keys[3], (2 * D, N), 1.0),
        ema_beta=nrm(keys[4], (2 * D, N), 0.1), ema_gamma=nrm(keys[5], (2 * D, N), 1.0),
        omega=nrm(keys[6], (1, D), 1.0),
        wv=nrm(keys[7], (D, H)), bv=nrm(keys[8], (1, H)),
        # mx_proj: single Linear(D, D + Z + H + D) kept fused (u | z | r | hx)
        wm=nrm(keys[9], (D, MX_OUT)), bm=nrm(keys[10], (1, MX_OUT)),
        qk_gamma=nrm(keys[11], (2, Z), 0.1), qk_beta=nrm(keys[12], (2, Z), 0.1),
        wh=nrm(keys[13], (H, D)), bh=nrm(keys[14], (1, D)),
        rel_pos=nrm(keys[15], (2 * MAX_POS - 1,), 0.02),
        ln2_w=1.0 + nrm(keys[16], (1, D), 0.1), ln2_b=nrm(keys[17], (1, D), 0.1),
        w1=nrm(keys[18], (D, F)), b1=nrm(keys[19], (1, F)),
        w2=nrm(keys[20], (F, D)), b2=nrm(keys[21], (1, D)),
    )


# ---- wrapper -----------------------------------------------------------------
@jax.jit
def mega_sentence_encoder_layer(x_lbd, params):
    """x_lbd: (L, B, D) sequence-first (PyTorch convention). Returns (x, attn)."""
    L, B, D = x_lbd.shape
    x = jnp.transpose(x_lbd, (1, 0, 2)).astype(jnp.float32)        # (B, L, D)

    ema_w = _build_ema_matrix(params['ema_delta'], params['ema_alpha'],
                              params['ema_beta'], params['ema_gamma'], L)  # (L, L, D) f32
    relbias = _build_rel_bias(params['rel_pos'], L)                        # (L, L) f32
    pk = _pack_small_params(params)                                        # (16, 144) f32

    # weight slabs: wv|wm|w1 share the D input rows; wh|w2 share H(=F) input rows.
    wd = _bf16(jnp.concatenate([params['wv'], params['wm'], params['w1']], axis=1))
    whw2 = _bf16(jnp.concatenate([params['wh'], params['w2']], axis=1))

    args = (x, pk, ema_w, relbias, wd, whw2)
    vmem_spec = pl.BlockSpec(memory_space=pltpu.MemorySpace.VMEM)

    out, attn = pl.pallas_call(
        _mega_kernel,
        out_shape=(jax.ShapeDtypeStruct((B, L, D), jnp.float32),
                   jax.ShapeDtypeStruct((B, L, L), jnp.float32)),
        in_specs=[vmem_spec] * len(args),
        out_specs=(vmem_spec, vmem_spec),
    )(*args)

    # head axis added here (free reshape); (L, B, D) layout restored for the caller.
    return jnp.transpose(out, (1, 0, 2)), attn[:, None, :, :]


if __name__ == "__main__":
    key = jax.random.PRNGKey(0)
    k_x, k_p = jax.random.split(key)
    x = jax.random.normal(k_x, (SEQ_LEN, BATCH, EMBED_DIM), dtype=jnp.float32)
    params = init_params(k_p)

    out, attn = mega_sentence_encoder_layer(x, params)
    jax.block_until_ready((out, attn))

    assert out.shape == (SEQ_LEN, BATCH, EMBED_DIM)
    assert attn.shape == (BATCH, 1, SEQ_LEN, SEQ_LEN)
    assert bool(jnp.all(jnp.isfinite(out))) and bool(jnp.all(jnp.isfinite(attn)))
    # attention rows must sum to 1 (softmax kept in f32 with exact reciprocal)
    assert bool(jnp.allclose(jnp.sum(attn, axis=-1), 1.0, atol=1e-5))
    print("KERNEL_OK")
</pallas_src>

<mosaic_0001>
module attributes {stable_mosaic.version = 11 : i64} {
  func.func @_mega_kernel(%arg0: memref<2x8x32xf32, #tpu.memory_space<vmem>>, %arg1: memref<16x144xf32, #tpu.memory_space<vmem>>, %arg2: memref<8x8x32xf32, #tpu.memory_space<vmem>>, %arg3: memref<8x8xf32, #tpu.memory_space<vmem>>, %arg4: memref<32x272xbf16, #tpu.memory_space<vmem>>, %arg5: memref<64x64xbf16, #tpu.memory_space<vmem>>, %arg6: memref<2x8x32xf32, #tpu.memory_space<vmem>>, %arg7: memref<2x8x8xf32, #tpu.memory_space<vmem>>) attributes {dimension_semantics = [], scalar_prefetch = 0 : i64, scratch_operands = 0 : i64, tpu.core_type = #tpu.core_type<tc>} {
    %c0 = arith.constant 0 : index
    %c0_0 = arith.constant 0 : index
    %0 = vector.load %arg1[%c0, %c0_0] : memref<16x144xf32, #tpu.memory_space<vmem>>, vector<16x144xf32>
    %1 = vector.extract_strided_slice %0 {offsets = [0, 0], sizes = [1, 32], strides = [1, 1]} : vector<16x144xf32> to vector<1x32xf32>
    %2 = vector.extract_strided_slice %0 {offsets = [1, 0], sizes = [1, 32], strides = [1, 1]} : vector<16x144xf32> to vector<1x32xf32>
    %3 = vector.extract_strided_slice %0 {offsets = [2, 0], sizes = [1, 32], strides = [1, 1]} : vector<16x144xf32> to vector<1x32xf32>
    %4 = vector.extract_strided_slice %0 {offsets = [3, 0], sizes = [1, 64], strides = [1, 1]} : vector<16x144xf32> to vector<1x64xf32>
    %5 = vector.extract_strided_slice %0 {offsets = [4, 0], sizes = [1, 144], strides = [1, 1]} : vector<16x144xf32> to vector<1x144xf32>
    %6 = vector.extract_strided_slice %0 {offsets = [5, 0], sizes = [1, 16], strides = [1, 1]} : vector<16x144xf32> to vector<1x16xf32>
    %7 = vector.extract_strided_slice %0 {offsets = [6, 0], sizes = [1, 16], strides = [1, 1]} : vector<16x144xf32> to vector<1x16xf32>
    %8 = vector.extract_strided_slice %0 {offsets = [7, 0], sizes = [1, 16], strides = [1, 1]} : vector<16x144xf32> to vector<1x16xf32>
    %9 = vector.extract_strided_slice %0 {offsets = [8, 0], sizes = [1, 16], strides = [1, 1]} : vector<16x144xf32> to vector<1x16xf32>
    %10 = vector.extract_strided_slice %0 {offsets = [9, 0], sizes = [1, 32], strides = [1, 1]} : vector<16x144xf32> to vector<1x32xf32>
    %11 = vector.extract_strided_slice %0 {offsets = [10, 0], sizes = [1, 32], strides = [1, 1]} : vector<16x144xf32> to vector<1x32xf32>
    %12 = vector.extract_strided_slice %0 {offsets = [11, 0], sizes = [1, 32], strides = [1, 1]} : vector<16x144xf32> to vector<1x32xf32>
    %13 = vector.extract_strided_slice %0 {offsets = [12, 0], sizes = [1, 64], strides = [1, 1]} : vector<16x144xf32> to vector<1x64xf32>
    %14 = vector.extract_strided_slice %0 {offsets = [13, 0], sizes = [1, 32], strides = [1, 1]} : vector<16x144xf32> to vector<1x32xf32>
    %c0_1 = arith.constant 0 : index
    %c0_2 = arith.constant 0 : index
    %15 = vector.load %arg4[%c0_1, %c0_2] : memref<32x272xbf16, #tpu.memory_space<vmem>>, vector<32x272xbf16>
    %16 = vector.extract_strided_slice %15 {offsets = [0, 0], sizes = [32, 64], strides = [1, 1]} : vector<32x272xbf16> to vector<32x64xbf16>
    %17 = vector.extract_strided_slice %15 {offsets = [0, 64], sizes = [32, 144], strides = [1, 1]} : vector<32x272xbf16> to vector<32x144xbf16>
    %18 = vector.extract_strided_slice %15 {offsets = [0, 208], sizes = [32, 64], strides = [1, 1]} : vector<32x272xbf16> to vector<32x64xbf16>
    %c0_3 = arith.constant 0 : index
    %c0_4 = arith.constant 0 : index
    %19 = vector.load %arg5[%c0_3, %c0_4] : memref<64x64xbf16, #tpu.memory_space<vmem>>, vector<64x64xbf16>
    %20 = vector.extract_strided_slice %19 {offsets = [0, 0], sizes = [64, 32], strides = [1, 1]} : vector<64x64xbf16> to vector<64x32xbf16>
    %21 = vector.extract_strided_slice %19 {offsets = [0, 32], sizes = [64, 32], strides = [1, 1]} : vector<64x64xbf16> to vector<64x32xbf16>
    %c0_5 = arith.constant 0 : index
    %c0_6 = arith.constant 0 : index
    %c0_7 = arith.constant 0 : index
    %22 = vector.load %arg0[%c0_5, %c0_6, %c0_7] : memref<2x8x32xf32, #tpu.memory_space<vmem>>, vector<2x8x32xf32>
    %23 = vector.shape_cast %22 : vector<2x8x32xf32> to vector<16x32xf32>
    %cst = arith.constant dense<0.000000e+00> : vector<16xf32>
    %24 = vector.multi_reduction <add>, %23, %cst [1] : vector<16x32xf32> to vector<16xf32>
    %25 = vector.shape_cast %24 : vector<16xf32> to vector<16x1xf32>
    %cst_8 = arith.constant 3.200000e+01 : f32
    %26 = vector.broadcast %cst_8 : f32 to vector<16x1xf32>
    %27 = arith.divf %25, %26 : vector<16x1xf32>
    %28 = vector.broadcast %27 : vector<16x1xf32> to vector<16x32xf32>
    %29 = arith.subf %23, %28 : vector<16x32xf32>
    %30 = arith.mulf %29, %29 : vector<16x32xf32>
    %cst_9 = arith.constant dense<0.000000e+00> : vector<16xf32>
    %31 = vector.multi_reduction <add>, %30, %cst_9 [1] : vector<16x32xf32> to vector<16xf32>
    %32 = vector.shape_cast %31 : vector<16xf32> to vector<16x1xf32>
    %cst_10 = arith.constant 3.200000e+01 : f32
    %33 = vector.broadcast %cst_10 : f32 to vector<16x1xf32>
    %34 = arith.divf %32, %33 : vector<16x1xf32>
    %35 = vector.broadcast %27 : vector<16x1xf32> to vector<16x32xf32>
    %36 = arith.subf %23, %35 : vector<16x32xf32>
    %cst_11 = arith.constant 9.99999974E-6 : f32
    %37 = vector.broadcast %cst_11 : f32 to vector<16x1xf32>
    %38 = arith.addf %34, %37 : vector<16x1xf32>
    %39 = math.rsqrt %38 : vector<16x1xf32>
    %40 = vector.broadcast %39 : vector<16x1xf32> to vector<16x32xf32>
    %41 = arith.mulf %36, %40 : vector<16x32xf32>
    %42 = vector.broadcast %1 : vector<1x32xf32> to vector<16x32xf32>
    %43 = arith.mulf %41, %42 : vector<16x32xf32>
    %44 = vector.broadcast %2 : vector<1x32xf32> to vector<16x32xf32>
    %45 = arith.addf %43, %44 : vector<16x32xf32>
    %46 = arith.truncf %45 : vector<16x32xf32> to vector<16x32xbf16>
    %cst_12 = arith.constant dense<0.000000e+00> : vector<16x64xf32>
    %47 = tpu.matmul %46, %16, %cst_12 {dimension_numbers = #tpu.dot_dimension_numbers<[1], [0], [0], [1], [0, 0, 1, 1], [], []>} : vector<16x32xbf16>, vector<32x64xbf16>, vector<16x64xf32> -> vector<16x64xf32>
    %48 = vector.broadcast %4 : vector<1x64xf32> to vector<16x64xf32>
    %49 = arith.addf %47, %48 : vector<16x64xf32>
    %cst_13 = arith.constant 0.000000e+00 : f32
    %50 = vector.broadcast %cst_13 : f32 to vector<16x64xf32>
    %51 = arith.subf %50, %49 : vector<16x64xf32>
    %52 = math.exp %51 : vector<16x64xf32>
    %cst_14 = arith.constant 1.000000e+00 : f32
    %53 = vector.broadcast %cst_14 : f32 to vector<16x64xf32>
    %54 = arith.addf %53, %52 : vector<16x64xf32>
    %cst_15 = arith.constant 1.000000e+00 : f32
    %55 = vector.broadcast %cst_15 : f32 to vector<16x64xf32>
    %56 = arith.divf %55, %54 : vector<16x64xf32>
    %57 = arith.mulf %49, %56 : vector<16x64xf32>
    %58 = vector.shape_cast %45 : vector<16x32xf32> to vector<2x8x32xf32>
    %c0_16 = arith.constant 0 : index
    %c0_17 = arith.constant 0 : index
    %c0_18 = arith.constant 0 : index
    %59 = vector.load %arg2[%c0_16, %c0_17, %c0_18] : memref<8x8x32xf32, #tpu.memory_space<vmem>>, vector<8x8x32xf32>
    %60 = vector.shape_cast %59 : vector<8x8x32xf32> to vector<1x8x8x32xf32>
    %61 = vector.shape_cast %58 : vector<2x8x32xf32> to vector<2x1x8x32xf32>
    %62 = vector.broadcast %60 : vector<1x8x8x32xf32> to vector<2x8x8x32xf32>
    %63 = vector.broadcast %61 : vector<2x1x8x32xf32> to vector<2x8x8x32xf32>
    %64 = arith.mulf %62, %63 : vector<2x8x8x32xf32>
    %cst_19 = arith.constant dense<0.000000e+00> : vector<2x8x32xf32>
    %65 = vector.multi_reduction <add>, %64, %cst_19 [2] : vector<2x8x8x32xf32> to vector<2x8x32xf32>
    %66 = vector.shape_cast %65 : vector<2x8x32xf32> to vector<16x32xf32>
    %67 = vector.broadcast %3 : vector<1x32xf32> to vector<16x32xf32>
    %68 = arith.mulf %45, %67 : vector<16x32xf32>
    %69 = arith.addf %66, %68 : vector<16x32xf32>
    %cst_20 = arith.constant 0.000000e+00 : f32
    %70 = vector.broadcast %cst_20 : f32 to vector<16x32xf32>
    %71 = arith.subf %70, %69 : vector<16x32xf32>
    %72 = math.exp %71 : vector<16x32xf32>
    %cst_21 = arith.constant 1.000000e+00 : f32
    %73 = vector.broadcast %cst_21 : f32 to vector<16x32xf32>
    %74 = arith.addf %73, %72 : vector<16x32xf32>
    %cst_22 = arith.constant 1.000000e+00 : f32
    %75 = vector.broadcast %cst_22 : f32 to vector<16x32xf32>
    %76 = arith.divf %75, %74 : vector<16x32xf32>
    %77 = arith.mulf %69, %76 : vector<16x32xf32>
    %78 = arith.truncf %77 : vector<16x32xf32> to vector<16x32xbf16>
    %cst_23 = arith.constant dense<0.000000e+00> : vector<16x144xf32>
    %79 = tpu.matmul %78, %17, %cst_23 {dimension_numbers = #tpu.dot_dimension_numbers<[1], [0], [0], [1], [0, 0, 1, 1], [], []>} : vector<16x32xbf16>, vector<32x144xbf16>, vector<16x144xf32> -> vector<16x144xf32>
    %80 = vector.broadcast %5 : vector<1x144xf32> to vector<16x144xf32>
    %81 = arith.addf %79, %80 : vector<16x144xf32>
    %82 = vector.extract_strided_slice %81 {offsets = [0, 0], sizes = [16, 32], strides = [1, 1]} : vector<16x144xf32> to vector<16x32xf32>
    %cst_24 = arith.constant 0.000000e+00 : f32
    %83 = vector.broadcast %cst_24 : f32 to vector<16x32xf32>
    %84 = arith.subf %83, %82 : vector<16x32xf32>
    %85 = math.exp %84 : vector<16x32xf32>
    %cst_25 = arith.constant 1.000000e+00 : f32
    %86 = vector.broadcast %cst_25 : f32 to vector<16x32xf32>
    %87 = arith.addf %86, %85 : vector<16x32xf32>
    %cst_26 = arith.constant 1.000000e+00 : f32
    %88 = vector.broadcast %cst_26 : f32 to vector<16x32xf32>
    %89 = arith.divf %88, %87 : vector<16x32xf32>
    %90 = vector.extract_strided_slice %81 {offsets = [0, 32], sizes = [16, 80], strides = [1, 1]} : vector<16x144xf32> to vector<16x80xf32>
    %cst_27 = arith.constant 0.000000e+00 : f32
    %91 = vector.broadcast %cst_27 : f32 to vector<16x80xf32>
    %92 = arith.subf %91, %90 : vector<16x80xf32>
    %93 = math.exp %92 : vector<16x80xf32>
    %cst_28 = arith.constant 1.000000e+00 : f32
    %94 = vector.broadcast %cst_28 : f32 to vector<16x80xf32>
    %95 = arith.addf %94, %93 : vector<16x80xf32>
    %cst_29 = arith.constant 1.000000e+00 : f32
    %96 = vector.broadcast %cst_29 : f32 to vector<16x80xf32>
    %97 = arith.divf %96, %95 : vector<16x80xf32>
    %98 = arith.mulf %90, %97 : vector<16x80xf32>
    %99 = vector.extract_strided_slice %98 {offsets = [0, 0], sizes = [16, 16], strides = [1, 1]} : vector<16x80xf32> to vector<16x16xf32>
    %100 = vector.extract_strided_slice %98 {offsets = [0, 16], sizes = [16, 64], strides = [1, 1]} : vector<16x80xf32> to vector<16x64xf32>
    %101 = vector.extract_strided_slice %81 {offsets = [0, 112], sizes = [16, 32], strides = [1, 1]} : vector<16x144xf32> to vector<16x32xf32>
    %102 = vector.broadcast %6 : vector<1x16xf32> to vector<16x16xf32>
    %103 = arith.mulf %99, %102 : vector<16x16xf32>
    %104 = vector.broadcast %8 : vector<1x16xf32> to vector<16x16xf32>
    %105 = arith.addf %103, %104 : vector<16x16xf32>
    %cst_30 = arith.constant 2.500000e-01 : f32
    %106 = vector.broadcast %cst_30 : f32 to vector<16x16xf32>
    %107 = arith.mulf %105, %106 : vector<16x16xf32>
    %108 = arith.truncf %107 : vector<16x16xf32> to vector<16x16xbf16>
    %109 = vector.broadcast %7 : vector<1x16xf32> to vector<16x16xf32>
    %110 = arith.mulf %99, %109 : vector<16x16xf32>
    %111 = vector.broadcast %9 : vector<1x16xf32> to vector<16x16xf32>
    %112 = arith.addf %110, %111 : vector<16x16xf32>
    %113 = arith.truncf %112 : vector<16x16xf32> to vector<16x16xbf16>
    %114 = vector.shape_cast %108 : vector<16x16xbf16> to vector<2x8x16xbf16>
    %115 = vector.shape_cast %113 : vector<16x16xbf16> to vector<2x8x16xbf16>
    "tpu.trace_start"() <{level = 10 : i32, message = "blz,bmz->blm"}> : () -> ()
    %cst_31 = arith.constant dense<0.000000e+00> : vector<2x8x8xf32>
    %116 = tpu.matmul %114, %115, %cst_31 {dimension_numbers = #tpu.dot_dimension_numbers<[2], [2], [1], [1], [0, 0, 0, 1, 1, 1], [0], [0]>} : vector<2x8x16xbf16>, vector<2x8x16xbf16>, vector<2x8x8xf32> -> vector<2x8x8xf32>
    "tpu.trace_stop"() : () -> ()
    %c0_32 = arith.constant 0 : index
    %c0_33 = arith.constant 0 : index
    %117 = vector.load %arg3[%c0_32, %c0_33] : memref<8x8xf32, #tpu.memory_space<vmem>>, vector<8x8xf32>
    %118 = vector.shape_cast %117 : vector<8x8xf32> to vector<1x8x8xf32>
    %119 = vector.broadcast %118 : vector<1x8x8xf32> to vector<2x8x8xf32>
    %120 = arith.addf %116, %119 : vector<2x8x8xf32>
    %cst_34 = arith.constant dense<0xFF800000> : vector<2x8xf32>
    %121 = vector.multi_reduction <maximumf>, %120, %cst_34 [2] : vector<2x8x8xf32> to vector<2x8xf32>
    %122 = vector.shape_cast %121 : vector<2x8xf32> to vector<2x8x1xf32>
    %123 = vector.broadcast %122 : vector<2x8x1xf32> to vector<2x8x8xf32>
    %124 = arith.subf %120, %123 : vector<2x8x8xf32>
    %125 = math.exp %124 : vector<2x8x8xf32>
    %cst_35 = arith.constant dense<0.000000e+00> : vector<2x8xf32>
    %126 = vector.multi_reduction <add>, %125, %cst_35 [2] : vector<2x8x8xf32> to vector<2x8xf32>
    %127 = vector.shape_cast %126 : vector<2x8xf32> to vector<2x8x1xf32>
    %128 = tpu.reciprocal %127 : vector<2x8x1xf32> -> vector<2x8x1xf32>
    %129 = vector.broadcast %128 : vector<2x8x1xf32> to vector<2x8x8xf32>
    %130 = arith.mulf %125, %129 : vector<2x8x8xf32>
    %131 = arith.truncf %130 : vector<2x8x8xf32> to vector<2x8x8xbf16>
    %132 = vector.shape_cast %57 : vector<16x64xf32> to vector<2x8x64xf32>
    %133 = arith.truncf %132 : vector<2x8x64xf32> to vector<2x8x64xbf16>
    "tpu.trace_start"() <{level = 10 : i32, message = "blm,bmh->blh"}> : () -> ()
    %cst_36 = arith.constant dense<0.000000e+00> : vector<2x8x64xf32>
    %134 = tpu.matmul %131, %133, %cst_36 {dimension_numbers = #tpu.dot_dimension_numbers<[2], [1], [1], [2], [0, 0, 0, 1, 1, 2], [0], [0]>} : vector<2x8x8xbf16>, vector<2x8x64xbf16>, vector<2x8x64xf32> -> vector<2x8x64xf32>
    "tpu.trace_stop"() : () -> ()
    %135 = vector.shape_cast %134 : vector<2x8x64xf32> to vector<16x64xf32>
    %136 = arith.mulf %135, %100 : vector<16x64xf32>
    %137 = arith.truncf %136 : vector<16x64xf32> to vector<16x64xbf16>
    %cst_37 = arith.constant dense<0.000000e+00> : vector<16x32xf32>
    %138 = tpu.matmul %137, %20, %cst_37 {dimension_numbers = #tpu.dot_dimension_numbers<[1], [0], [0], [1], [0, 0, 1, 1], [], []>} : vector<16x64xbf16>, vector<64x32xbf16>, vector<16x32xf32> -> vector<16x32xf32>
    %139 = arith.addf %101, %138 : vector<16x32xf32>
    %140 = vector.broadcast %10 : vector<1x32xf32> to vector<16x32xf32>
    %141 = arith.addf %139, %140 : vector<16x32xf32>
    %cst_38 = arith.constant 0.000000e+00 : f32
    %142 = vector.broadcast %cst_38 : f32 to vector<16x32xf32>
    %143 = arith.subf %142, %141 : vector<16x32xf32>
    %144 = math.exp %143 : vector<16x32xf32>
    %cst_39 = arith.constant 1.000000e+00 : f32
    %145 = vector.broadcast %cst_39 : f32 to vector<16x32xf32>
    %146 = arith.addf %145, %144 : vector<16x32xf32>
    %cst_40 = arith.constant 1.000000e+00 : f32
    %147 = vector.broadcast %cst_40 : f32 to vector<16x32xf32>
    %148 = arith.divf %147, %146 : vector<16x32xf32>
    %149 = arith.mulf %141, %148 : vector<16x32xf32>
    %150 = arith.subf %149, %23 : vector<16x32xf32>
    %151 = arith.mulf %89, %150 : vector<16x32xf32>
    %152 = arith.addf %23, %151 : vector<16x32xf32>
    %cst_41 = arith.constant dense<0.000000e+00> : vector<16xf32>
    %153 = vector.multi_reduction <add>, %152, %cst_41 [1] : vector<16x32xf32> to vector<16xf32>
    %154 = vector.shape_cast %153 : vector<16xf32> to vector<16x1xf32>
    %cst_42 = arith.constant 3.200000e+01 : f32
    %155 = vector.broadcast %cst_42 : f32 to vector<16x1xf32>
    %156 = arith.divf %154, %155 : vector<16x1xf32>
    %157 = vector.broadcast %156 : vector<16x1xf32> to vector<16x32xf32>
    %158 = arith.subf %152, %157 : vector<16x32xf32>
    %159 = arith.mulf %158, %158 : vector<16x32xf32>
    %cst_43 = arith.constant dense<0.000000e+00> : vector<16xf32>
    %160 = vector.multi_reduction <add>, %159, %cst_43 [1] : vector<16x32xf32> to vector<16xf32>
    %161 = vector.shape_cast %160 : vector<16xf32> to vector<16x1xf32>
    %cst_44 = arith.constant 3.200000e+01 : f32
    %162 = vector.broadcast %cst_44 : f32 to vector<16x1xf32>
    %163 = arith.divf %161, %162 : vector<16x1xf32>
    %164 = vector.broadcast %156 : vector<16x1xf32> to vector<16x32xf32>
    %165 = arith.subf %152, %164 : vector<16x32xf32>
    %cst_45 = arith.constant 9.99999974E-6 : f32
    %166 = vector.broadcast %cst_45 : f32 to vector<16x1xf32>
    %167 = arith.addf %163, %166 : vector<16x1xf32>
    %168 = math.rsqrt %167 : vector<16x1xf32>
    %169 = vector.broadcast %168 : vector<16x1xf32> to vector<16x32xf32>
    %170 = arith.mulf %165, %169 : vector<16x32xf32>
    %171 = vector.broadcast %11 : vector<1x32xf32> to vector<16x32xf32>
    %172 = arith.mulf %170, %171 : vector<16x32xf32>
    %173 = vector.broadcast %12 : vector<1x32xf32> to vector<16x32xf32>
    %174 = arith.addf %172, %173 : vector<16x32xf32>
    %175 = arith.truncf %174 : vector<16x32xf32> to vector<16x32xbf16>
    %cst_46 = arith.constant dense<0.000000e+00> : vector<16x64xf32>
    %176 = tpu.matmul %175, %18, %cst_46 {dimension_numbers = #tpu.dot_dimension_numbers<[1], [0], [0], [1], [0, 0, 1, 1], [], []>} : vector<16x32xbf16>, vector<32x64xbf16>, vector<16x64xf32> -> vector<16x64xf32>
    %177 = vector.broadcast %13 : vector<1x64xf32> to vector<16x64xf32>
    %178 = arith.addf %176, %177 : vector<16x64xf32>
    %cst_47 = arith.constant 0.000000e+00 : f32
    %179 = vector.broadcast %cst_47 : f32 to vector<16x64xf32>
    %180 = arith.subf %179, %178 : vector<16x64xf32>
    %181 = math.exp %180 : vector<16x64xf32>
    %cst_48 = arith.constant 1.000000e+00 : f32
    %182 = vector.broadcast %cst_48 : f32 to vector<16x64xf32>
    %183 = arith.addf %182, %181 : vector<16x64xf32>
    %cst_49 = arith.constant 1.000000e+00 : f32
    %184 = vector.broadcast %cst_49 : f32 to vector<16x64xf32>
    %185 = arith.divf %184, %183 : vector<16x64xf32>
    %186 = arith.mulf %178, %185 : vector<16x64xf32>
    %187 = arith.truncf %186 : vector<16x64xf32> to vector<16x64xbf16>
    %cst_50 = arith.constant dense<0.000000e+00> : vector<16x32xf32>
    %188 = tpu.matmul %187, %21, %cst_50 {dimension_numbers = #tpu.dot_dimension_numbers<[1], [0], [0], [1], [0, 0, 1, 1], [], []>} : vector<16x64xbf16>, vector<64x32xbf16>, vector<16x32xf32> -> vector<16x32xf32>
    %189 = vector.broadcast %14 : vector<1x32xf32> to vector<16x32xf32>
    %190 = arith.addf %188, %189 : vector<16x32xf32>
    %191 = arith.addf %190, %152 : vector<16x32xf32>
    %192 = vector.shape_cast %191 : vector<16x32xf32> to vector<2x8x32xf32>
    %c0_51 = arith.constant 0 : index
    %c0_52 = arith.constant 0 : index
    %c0_53 = arith.constant 0 : index
    %193 = vector.load %arg6[%c0_51, %c0_52, %c0_53] : memref<2x8x32xf32, #tpu.memory_space<vmem>>, vector<2x8x32xf32>
    tpu.vector_store %arg6[%c0_51, %c0_52, %c0_53], %192 {strides = array<i32>} : memref<2x8x32xf32, #tpu.memory_space<vmem>>, vector<2x8x32xf32>,
    %c0_54 = arith.constant 0 : index
    %c0_55 = arith.constant 0 : index
    %c0_56 = arith.constant 0 : index
    %194 = vector.load %arg7[%c0_54, %c0_55, %c0_56] : memref<2x8x8xf32, #tpu.memory_space<vmem>>, vector<2x8x8xf32>
    tpu.vector_store %arg7[%c0_54, %c0_55, %c0_56], %130 {strides = array<i32>} : memref<2x8x8xf32, #tpu.memory_space<vmem>>, vector<2x8x8xf32>,
    return
  }
}

</mosaic_0001>

<llo_original>
// kernel: mega_sentence_encoder_layer.1
$region0: #{mega_sentence_encoder_layer.1}
  #allocation0 [shape = 'u32[]', space=smem, size = 0x4, offset = 0x4, fixed_abs, tag = 'smem constant byte address 0x4 - core index']
  #allocation1 [shape = 'u32[72,128]{1,0:T(1,128)}', space=vmem, size = 0x9000, scoped, tag = 'internal scratch']
  %s0 = inlined_call_operand.vmem [shape: f32[2,8,32], index: 0, kind: input, shape index: {}]
  %s1 = inlined_call_operand.vmem [shape: f32[16,144], index: 1, kind: input, shape index: {}]
  %s2 = inlined_call_operand.vmem [shape: f32[8,8,32], index: 2, kind: input, shape index: {}]
  %s3 = inlined_call_operand.vmem [shape: f32[8,8], index: 3, kind: input, shape index: {}]
  %s4 = inlined_call_operand.vmem [shape: bf16[32,272], index: 4, kind: input, shape index: {}]
  %s5 = inlined_call_operand.vmem [shape: bf16[64,64], index: 5, kind: input, shape index: {}]
  %s6 = inlined_call_operand.vmem [shape: f32[2,8,32], index: 6, kind: output, shape index: {0}]
  %s7 = inlined_call_operand.hbm [shape: f32[2,8,8], index: 7, kind: output, shape index: {1}]
  %8 = xla_tuple %s6, %s7
  %s9 = sld [smem:[#allocation0]]
  $region42: #{mega_sentence_encoder_layer.1} parent=0
    _
  %s11 = ssub.s32 1, %s9
  %s12 = scalar_select 0, %s11, %s9
  $region1: #{mega_sentence_encoder_layer.1} parent=0
    #allocation2 [shape = 'u8[8192]{0}', space=vmem, size = 0x2000, scoped, tag = 'output window, operand 1, single buffered']
    #allocation3 [shape = 's32[1]{0}', space=sflag, size = 0x4, scoped, tag = 'scoped memory for mega_sentence_encoder_layer.1']
    %13 = vsyncpa [#allocation3], 0
    // Predicated region
    $region2: #{mega_sentence_encoder_layer.1} parent=1 // pred_check
      _
    $region3: #{mega_sentence_encoder_layer.1} parent=1 // pred_check_branch
      %15 = sbr.rel (0) target = $region5
    $region4: #{mega_sentence_encoder_layer.1} parent=1 // pred_region
      _
    $region5: #{mega_sentence_encoder_layer.1} parent=1 // pred_fallthru
      _
    // Predicated region
    $region6: #{mega_sentence_encoder_layer.1} parent=1 // pred_check
      _
    $region7: #{mega_sentence_encoder_layer.1} parent=1 // pred_check_branch
      %17 = sbr.rel (0) target = $region9
    $region8: #{mega_sentence_encoder_layer.1} parent=1 // pred_region
      _
    $region9: #{mega_sentence_encoder_layer.1} parent=1 // pred_fallthru
      _
    // Predicated region
    $region10: #{mega_sentence_encoder_layer.1} parent=1 // pred_check
      _
    $region11: #{mega_sentence_encoder_layer.1} parent=1 // pred_check_branch
      %19 = sbr.rel (0) target = $region13
    $region12: #{mega_sentence_encoder_layer.1} parent=1 // pred_region
      _
    $region13: #{mega_sentence_encoder_layer.1} parent=1 // pred_fallthru
      _
    // Predicated region
    $region14: #{mega_sentence_encoder_layer.1} parent=1 // pred_check
      _
    $region15: #{mega_sentence_encoder_layer.1} parent=1 // pred_check_branch
      %21 = sbr.rel (0) target = $region17
    $region16: #{mega_sentence_encoder_layer.1} parent=1 // pred_region
      _
    $region17: #{mega_sentence_encoder_layer.1} parent=1 // pred_fallthru
      _
    // Predicated region
    $region18: #{mega_sentence_encoder_layer.1} parent=1 // pred_check
      _
    $region19: #{mega_sentence_encoder_layer.1} parent=1 // pred_check_branch
      %23 = sbr.rel (0) target = $region21
    $region20: #{mega_sentence_encoder_layer.1} parent=1 // pred_region
      _
    $region21: #{mega_sentence_encoder_layer.1} parent=1 // pred_fallthru
      _
    // Predicated region
    $region22: #{mega_sentence_encoder_layer.1} parent=1 // pred_check
      _
    $region23: #{mega_sentence_encoder_layer.1} parent=1 // pred_check_branch
      %25 = sbr.rel (0) target = $region25
    $region24: #{mega_sentence_encoder_layer.1} parent=1 // pred_region
      _
    $region25: #{mega_sentence_encoder_layer.1} parent=1 // pred_fallthru
      _
    %v27 = vld [vmem:[%s1] sm:$0xff]
    %v28 = vld [vmem:[%s1 + $0x8] sm:$0xff]
    %v29 = vld [vmem:[%s1 + $0x10] sm:$0xff]
    %v30 = vld [vmem:[%s4] sm:$0xff]
    %v31 = vld [vmem:[%s4 + $0x8] sm:$0xf]
    %v32 = vld [vmem:[%s4 + $0xc] sm:$0xff]
    %v33 = vld [vmem:[%s4 + $0x14] sm:$0xf]
    %v34 = vld [vmem:[%s4 + $0x18] sm:$0xff]
    %v35 = vld [vmem:[%s4 + $0x20] sm:$0xf]
    %v36 = vld [vmem:[%s4 + $0x24] sm:$0xff]
    %v37 = vld [vmem:[%s4 + $0x2c] sm:$0xf]
    %v38 = vld [vmem:[%s5] sm:$0xf]
    %v39 = vld [vmem:[%s5 + $0x4] sm:$0xf]
    %v40 = vld [vmem:[%s5 + $0x8] sm:$0xf]
    %v41 = vld [vmem:[%s5 + $0xc] sm:$0xf]
    %v42 = vld [vmem:[%s5 + $0x10] sm:$0xf]
    %v43 = vld [vmem:[%s5 + $0x14] sm:$0xf]
    %v44 = vld [vmem:[%s5 + $0x18] sm:$0xf]
    %v45 = vld [vmem:[%s5 + $0x1c] sm:$0xf]
    %v46 = vld [vmem:[%s0] sm:$0xff]
    %v47 = vld [vmem:[%s0 + $0x8] sm:$0xff]
    %vm48 = vcmask 261120
    %v49 = vsel %vm48, %v46, 0.0
    %50 = vadd.xlane.f32.xlu0 %v49
    %v51 = vpop.xlane.xlu0 %50
    %v52 = vsel %vm48, %v47, 0.0
    %53 = vadd.xlane.f32.xlu0 %v52
    %v54 = vpop.xlane.xlu0 %53
    %v55 = vrcp.pop 32.0
    %v56 = vmul.f32 32.0, %v55
    %v57 = vsub.f32 1.0, %v56
    %v58 = vmul.f32 %v55, %v57
    %v59 = vadd.f32 %v55, %v58
    %vm60 = vweird.f32 %v55
    %v61 = vsel %vm60, %v55, %v59
    %v62 = vmul.f32 %v51, %v61
    %v63 = vmul.f32 %v54, %v61
    %v64 = vsub.f32 %v46, %v62
    %v65 = vsub.f32 %v47, %v63
    %v66 = vmul.f32 %v64, %v64
    %v67 = vmul.f32 %v65, %v65
    %v68 = vsel %vm48, %v66, 0.0
    %69 = vadd.xlane.f32.xlu0 %v68
    %v70 = vpop.xlane.xlu0 %69
    %v71 = vsel %vm48, %v67, 0.0
    %72 = vadd.xlane.f32.xlu0 %v71
    %v73 = vpop.xlane.xlu0 %72
    %v74 = vmul.f32 %v70, %v61
    %v75 = vmul.f32 %v73, %v61
    %v76 = vadd.f32 %v74, 1e-05
    %v77 = vadd.f32 %v75, 1e-05
    %v78 = vrsqrt.pop %v76
    %v79 = vmul.f32 %v78, %v76
    %v80 = vmul.f32 %v79, %v78
    %v81 = vmul.f32 0.5, %v80
    %v82 = vsub.f32 1.5, %v81
    %v83 = vmul.f32 %v78, %v82
    %vm84 = vweird.f32 %v76
    %vm85 = vweird.f32 %v78
    %vm86 = vmor %vm84, %vm85
    %v87 = vsel %vm86, %v78, %v83
    %v88 = vrsqrt.pop %v77
    %v89 = vmul.f32 %v88, %v77
    %v90 = vmul.f32 %v89, %v88
    %v91 = vmul.f32 0.5, %v90
    %v92 = vsub.f32 1.5, %v91
    %v93 = vmul.f32 %v88, %v92
    %vm94 = vweird.f32 %v77
    %vm95 = vweird.f32 %v88
    %vm96 = vmor %vm94, %vm95
    %v97 = vsel %vm96, %v88, %v93
    %v98 = vmul.f32 %v64, %v87
    %v99 = vmul.f32 %v65, %v97
    %v100 = vperm.slane %v27, 0
    %v101 = vmul.f32 %v98, %v100
    %v102 = vmul.f32 %v99, %v100
    %v103 = vperm.slane %v27, 1
    %v104 = vadd.f32 %v101, %v103
    %v105 = vadd.f32 %v102, %v103
    %v106 = vpack.c.bf16 %v105, %v104
    %v107 = vperm.slane %v27, 3
    %v112 = vunpack.c.l.b16 %v30
    %v113 = vunpack.c.l.b16 %v32
    %v114 = vunpack.c.l.b16 %v34
    %v115 = vunpack.c.l.b16 %v36
    %v116 = vpack.c.b16 %v113, %v112
    %v117 = vpack.c.b16 %v115, %v114
    %v121 = vsel %vm48, %v106, 0
    %123 = vmatpush.bf16.msra.mxu0 0
    %124 = vmatpush.bf16.msra.mxu0 0
    %125 = vmatpush.bf16.msra.mxu0 0
    %126 = vmatpush.bf16.msra.mxu0 0
    %127 = vmatpush.bf16.msra.mxu0 0
    %128 = vmatpush.bf16.msra.mxu0 0
    %129 = vmatpush.bf16.msra.mxu0 %v117
    %130 = vmatpush.bf16.msra.mxu0 %v116
    %131 = vmatmul.bf16.gmra.mxu0 %v121
    %v132 = vpop.f32.mrf.mxu0
    %v133 = vadd.f32 %v107, %v132
    %v134 = vpop.f32.mrf.mxu0
    %v135 = vadd.f32 %v107, %v134
    %136 = vdwg.mxu0
    %v137 = vsub.f32 0.0, %v133
    %v138 = vsub.f32 0.0, %v135
    %v139 = vmul.f32 %v137, 1.442695
    %v140 = vpow.pop %v139
    %v141 = vmul.f32 %v138, 1.442695
    %v142 = vpow.pop %v141
    %v143 = vadd.f32 %v140, 1.0
    %v144 = vadd.f32 %v142, 1.0
    %v145 = vrcp.pop %v143
    %v146 = vmul.f32 %v143, %v145
    %v147 = vsub.f32 1.0, %v146
    %v148 = vmul.f32 %v145, %v147
    %v149 = vadd.f32 %v145, %v148
    %vm150 = vweird.f32 %v143
    %vm151 = vweird.f32 %v145
    %vm152 = vmor %vm150, %vm151
    %v153 = vsel %vm152, %v145, %v149
    %v154 = vand.u32 2147483647, %v143
    %vm155 = vcmp.eq.f32.partialorder %v154, 8.507059e+37
    %v156 = vand.u32 %v143, 2147483648
    %v157 = vor.u32 1.1754944e-38, %v156
    %v158 = vsel %vm155, %v157, %v153
    %v159 = vmul.f32 1.0, %v158
    %v160 = vrcp.pop %v144
    %v161 = vmul.f32 %v144, %v160
    %v162 = vsub.f32 1.0, %v161
    %v163 = vmul.f32 %v160, %v162
    %v164 = vadd.f32 %v160, %v163
    %vm165 = vweird.f32 %v144
    %vm166 = vweird.f32 %v160
    %vm167 = vmor %vm165, %vm166
    %v168 = vsel %vm167, %v160, %v164
    %v169 = vand.u32 2147483647, %v144
    %vm170 = vcmp.eq.f32.partialorder %v169, 8.507059e+37
    %v171 = vand.u32 %v144, 2147483648
    %v172 = vor.u32 1.1754944e-38, %v171
    %v173 = vsel %vm170, %v172, %v168
    %v174 = vmul.f32 1.0, %v173
    %v175 = vmul.f32 %v133, %v159
    %v176 = vmul.f32 %v135, %v174
    %v177 = vld [vmem:[%s2] sm:$0xff]
    %v178 = vld [vmem:[%s2 + $0x8] sm:$0xff]
    %v179 = vld [vmem:[%s2 + $0x10] sm:$0xff]
    %v180 = vld [vmem:[%s2 + $0x18] sm:$0xff]
    %v181 = vld [vmem:[%s2 + $0x20] sm:$0xff]
    %v182 = vld [vmem:[%s2 + $0x28] sm:$0xff]
    %v183 = vld [vmem:[%s2 + $0x30] sm:$0xff]
    %v184 = vld [vmem:[%s2 + $0x38] sm:$0xff]
    %v185 = vmul.f32 %v177, %v104
    %v186 = vmul.f32 %v178, %v104
    %v187 = vmul.f32 %v179, %v104
    %v188 = vmul.f32 %v180, %v104
    %v189 = vmul.f32 %v181, %v104
    %v190 = vmul.f32 %v182, %v104
    %v191 = vmul.f32 %v183, %v104
    %v192 = vmul.f32 %v184, %v104
    %v193 = vmul.f32 %v177, %v105
    %v194 = vmul.f32 %v178, %v105
    %v195 = vmul.f32 %v179, %v105
    %v196 = vmul.f32 %v180, %v105
    %v197 = vmul.f32 %v181, %v105
    %v198 = vmul.f32 %v182, %v105
    %v199 = vmul.f32 %v183, %v105
    %v200 = vmul.f32 %v184, %v105
    %v201 = vsel %vm48, %v185, 0.0
    %v202 = vrot.slane %v201, 4
    %v203 = vadd.f32 %v201, %v202
    %v204 = vrot.slane %v203, 2
    %v205 = vadd.f32 %v203, %v204
    %v206 = vrot.slane %v205, 1
    %v207 = vadd.f32 %v205, %v206
    %v208 = vsel %vm48, %v186, 0.0
    %v209 = vrot.slane %v208, 4
    %v210 = vadd.f32 %v208, %v209
    %v211 = vrot.slane %v210, 2
    %v212 = vadd.f32 %v210, %v211
    %v213 = vrot.slane %v212, 1
    %v214 = vadd.f32 %v212, %v213
    %v215 = vsel %vm48, %v187, 0.0
    %v216 = vrot.slane %v215, 4
    %v217 = vadd.f32 %v215, %v216
    %v218 = vrot.slane %v217, 2
    %v219 = vadd.f32 %v217, %v218
    %v220 = vrot.slane %v219, 1
    %v221 = vadd.f32 %v219, %v220
    %v222 = vsel %vm48, %v188, 0.0
    %v223 = vrot.slane %v222, 4
    %v224 = vadd.f32 %v222, %v223
    %v225 = vrot.slane %v224, 2
    %v226 = vadd.f32 %v224, %v225
    %v227 = vrot.slane %v226, 1
    %v228 = vadd.f32 %v226, %v227
    %v229 = vsel %vm48, %v189, 0.0
    %v230 = vrot.slane %v229, 4
    %v231 = vadd.f32 %v229, %v230
    %v232 = vrot.slane %v231, 2
    %v233 = vadd.f32 %v231, %v232
    %v234 = vrot.slane %v233, 1
    %v235 = vadd.f32 %v233, %v234
    %v236 = vsel %vm48, %v190, 0.0
    %v237 = vrot.slane %v236, 4
    %v238 = vadd.f32 %v236, %v237
    %v239 = vrot.slane %v238, 2
    %v240 = vadd.f32 %v238, %v239
    %v241 = vrot.slane %v240, 1
    %v242 = vadd.f32 %v240, %v241
    %v243 = vsel %vm48, %v191, 0.0
    %v244 = vrot.slane %v243, 4
    %v245 = vadd.f32 %v243, %v244
    %v246 = vrot.slane %v245, 2
    %v247 = vadd.f32 %v245, %v246
    %v248 = vrot.slane %v247, 1
    %v249 = vadd.f32 %v247, %v248
    %v250 = vsel %vm48, %v192, 0.0
    %v251 = vrot.slane %v250, 4
    %v252 = vadd.f32 %v250, %v251
    %v253 = vrot.slane %v252, 2
    %v254 = vadd.f32 %v252, %v253
    %v255 = vrot.slane %v254, 1
    %v256 = vadd.f32 %v254, %v255
    %v257 = vsel %vm48, %v193, 0.0
    %v258 = vrot.slane %v257, 4
    %v259 = vadd.f32 %v257, %v258
    %v260 = vrot.slane %v259, 2
    %v261 = vadd.f32 %v259, %v260
    %v262 = vrot.slane %v261, 1
    %v263 = vadd.f32 %v261, %v262
    %v264 = vsel %vm48, %v194, 0.0
    %v265 = vrot.slane %v264, 4
    %v266 = vadd.f32 %v264, %v265
    %v267 = vrot.slane %v266, 2
    %v268 = vadd.f32 %v266, %v267
    %v269 = vrot.slane %v268, 1
    %v270 = vadd.f32 %v268, %v269
    %v271 = vsel %vm48, %v195, 0.0
    %v272 = vrot.slane %v271, 4
    %v273 = vadd.f32 %v271, %v272
    %v274 = vrot.slane %v273, 2
    %v275 = vadd.f32 %v273, %v274
    %v276 = vrot.slane %v275, 1
    %v277 = vadd.f32 %v275, %v276
    %v278 = vsel %vm48, %v196, 0.0
    %v279 = vrot.slane %v278, 4
    %v280 = vadd.f32 %v278, %v279
    %v281 = vrot.slane %v280, 2
    %v282 = vadd.f32 %v280, %v281
    %v283 = vrot.slane %v282, 1
    %v284 = vadd.f32 %v282, %v283
    %v285 = vsel %vm48, %v197, 0.0
    %v286 = vrot.slane %v285, 4
    %v287 = vadd.f32 %v285, %v286
    %v288 = vrot.slane %v287, 2
    %v289 = vadd.f32 %v287, %v288
    %v290 = vrot.slane %v289, 1
    %v291 = vadd.f32 %v289, %v290
    %v292 = vsel %vm48, %v198, 0.0
    %v293 = vrot.slane %v292, 4
    %v294 = vadd.f32 %v292, %v293
    %v295 = vrot.slane %v294, 2
    %v296 = vadd.f32 %v294, %v295
    %v297 = vrot.slane %v296, 1
    %v298 = vadd.f32 %v296, %v297
    %v299 = vsel %vm48, %v199, 0.0
    %v300 = vrot.slane %v299, 4
    %v301 = vadd.f32 %v299, %v300
    %v302 = vrot.slane %v301, 2
    %v303 = vadd.f32 %v301, %v302
    %v304 = vrot.slane %v303, 1
    %v305 = vadd.f32 %v303, %v304
    %v306 = vsel %vm48, %v200, 0.0
    %v307 = vrot.slane %v306, 4
    %v308 = vadd.f32 %v306, %v307
    %v309 = vrot.slane %v308, 2
    %v310 = vadd.f32 %v308, %v309
    %v311 = vrot.slane %v310, 1
    %v312 = vadd.f32 %v310, %v311
    %v313 = vperm.slane %v27, 2
    %v314 = vmul.f32 %v104, %v313
    %v315 = vmul.f32 %v105, %v313
    %v318 = vrot.slane %v314, 1
    %v319 = vrot.slane %v314, 2
    %v320 = vrot.slane %v314, 3
    %v321 = vrot.slane %v314, 4
    %v322 = vrot.slane %v314, 5
    %v323 = vrot.slane %v314, 6
    %v324 = vrot.slane %v314, 7
    %v325 = vrot.slane %v315, 1
    %v326 = vrot.slane %v315, 2
    %v327 = vrot.slane %v315, 3
    %v328 = vrot.slane %v315, 4
    %v329 = vrot.slane %v315, 5
    %v330 = vrot.slane %v315, 6
    %v331 = vrot.slane %v315, 7
    %v348 = vadd.f32 %v207, %v314
    %v349 = vadd.f32 %v214, %v318
    %v350 = vadd.f32 %v221, %v319
    %v351 = vadd.f32 %v228, %v320
    %v352 = vadd.f32 %v235, %v321
    %v353 = vadd.f32 %v242, %v322
    %v354 = vadd.f32 %v249, %v323
    %v355 = vadd.f32 %v256, %v324
    %v356 = vadd.f32 %v263, %v315
    %v357 = vadd.f32 %v270, %v325
    %v358 = vadd.f32 %v277, %v326
    %v359 = vadd.f32 %v284, %v327
    %v360 = vadd.f32 %v291, %v328
    %v361 = vadd.f32 %v298, %v329
    %v362 = vadd.f32 %v305, %v330
    %v363 = vadd.f32 %v312, %v331
    %v364 = vsub.f32 0.0, %v348
    %v365 = vsub.f32 0.0, %v349
    %v366 = vsub.f32 0.0, %v350
    %v367 = vsub.f32 0.0, %v351
    %v368 = vsub.f32 0.0, %v352
    %v369 = vsub.f32 0.0, %v353
    %v370 = vsub.f32 0.0, %v354
    %v371 = vsub.f32 0.0, %v355
    %v372 = vsub.f32 0.0, %v356
    %v373 = vsub.f32 0.0, %v357
    %v374 = vsub.f32 0.0, %v358
    %v375 = vsub.f32 0.0, %v359
    %v376 = vsub.f32 0.0, %v360
    %v377 = vsub.f32 0.0, %v361
    %v378 = vsub.f32 0.0, %v362
    %v379 = vsub.f32 0.0, %v363
    %v380 = vmul.f32 %v364, 1.442695
    %v381 = vpow.pop %v380
    %v382 = vmul.f32 %v365, 1.442695
    %v383 = vpow.pop %v382
    %v384 = vmul.f32 %v366, 1.442695
    %v385 = vpow.pop %v384
    %v386 = vmul.f32 %v367, 1.442695
    %v387 = vpow.pop %v386
    %v388 = vmul.f32 %v368, 1.442695
    %v389 = vpow.pop %v388
    %v390 = vmul.f32 %v369, 1.442695
    %v391 = vpow.pop %v390
    %v392 = vmul.f32 %v370, 1.442695
    %v393 = vpow.pop %v392
    %v394 = vmul.f32 %v371, 1.442695
    %v395 = vpow.pop %v394
    %v396 = vmul.f32 %v372, 1.442695
    %v397 = vpow.pop %v396
    %v398 = vmul.f32 %v373, 1.442695
    %v399 = vpow.pop %v398
    %v400 = vmul.f32 %v374, 1.442695
    %v401 = vpow.pop %v400
    %v402 = vmul.f32 %v375, 1.442695
    %v403 = vpow.pop %v402
    %v404 = vmul.f32 %v376, 1.442695
    %v405 = vpow.pop %v404
    %v406 = vmul.f32 %v377, 1.442695
    %v407 = vpow.pop %v406
    %v408 = vmul.f32 %v378, 1.442695
    %v409 = vpow.pop %v408
    %v410 = vmul.f32 %v379, 1.442695
    %v411 = vpow.pop %v410
    %v412 = vadd.f32 %v381, 1.0
    %v413 = vadd.f32 %v383, 1.0
    %v414 = vadd.f32 %v385, 1.0
    %v415 = vadd.f32 %v387, 1.0
    %v416 = vadd.f32 %v389, 1.0
    %v417 = vadd.f32 %v391, 1.0
    %v418 = vadd.f32 %v393, 1.0
    %v419 = vadd.f32 %v395, 1.0
    %v420 = vadd.f32 %v397, 1.0
    %v421 = vadd.f32 %v399, 1.0
    %v422 = vadd.f32 %v401, 1.0
    %v423 = vadd.f32 %v403, 1.0
    %v424 = vadd.f32 %v405, 1.0
    %v425 = vadd.f32 %v407, 1.0
    %v426 = vadd.f32 %v409, 1.0
    %v427 = vadd.f32 %v411, 1.0
    %v428 = vrcp.pop %v412
    %v429 = vmul.f32 %v412, %v428
    %v430 = vsub.f32 1.0, %v429
    %v431 = vmul.f32 %v428, %v430
    %v432 = vadd.f32 %v428, %v431
    %vm433 = vweird.f32 %v412
    %vm434 = vweird.f32 %v428
    %vm435 = vmor %vm433, %vm434
    %v436 = vsel %vm435, %v428, %v432
    %v437 = vand.u32 2147483647, %v412
    %vm438 = vcmp.eq.f32.partialorder %v437, 8.507059e+37
    %v439 = vand.u32 %v412, 2147483648
    %v440 = vor.u32 1.1754944e-38, %v439
    %v441 = vsel %vm438, %v440, %v436
    %v442 = vmul.f32 1.0, %v441
    %v443 = vrcp.pop %v413
    %v444 = vmul.f32 %v413, %v443
    %v445 = vsub.f32 1.0, %v444
    %v446 = vmul.f32 %v443, %v445
    %v447 = vadd.f32 %v443, %v446
    %vm448 = vweird.f32 %v413
    %vm449 = vweird.f32 %v443
    %vm450 = vmor %vm448, %vm449
    %v451 = vsel %vm450, %v443, %v447
    %v452 = vand.u32 2147483647, %v413
    %vm453 = vcmp.eq.f32.partialorder %v452, 8.507059e+37
    %v454 = vand.u32 %v413, 2147483648
    %v455 = vor.u32 1.1754944e-38, %v454
    %v456 = vsel %vm453, %v455, %v451
    %v457 = vmul.f32 1.0, %v456
    %v458 = vrcp.pop %v414
    %v459 = vmul.f32 %v414, %v458
    %v460 = vsub.f32 1.0, %v459
    %v461 = vmul.f32 %v458, %v460
    %v462 = vadd.f32 %v458, %v461
    %vm463 = vweird.f32 %v414
    %vm464 = vweird.f32 %v458
    %vm465 = vmor %vm463, %vm464
    %v466 = vsel %vm465, %v458, %v462
    %v467 = vand.u32 2147483647, %v414
    %vm468 = vcmp.eq.f32.partialorder %v467, 8.507059e+37
    %v469 = vand.u32 %v414, 2147483648
    %v470 = vor.u32 1.1754944e-38, %v469
    %v471 = vsel %vm468, %v470, %v466
    %v472 = vmul.f32 1.0, %v471
    %v473 = vrcp.pop %v415
    %v474 = vmul.f32 %v415, %v473
    %v475 = vsub.f32 1.0, %v474
    %v476 = vmul.f32 %v473, %v475
    %v477 = vadd.f32 %v473, %v476
    %vm478 = vweird.f32 %v415
    %vm479 = vweird.f32 %v473
    %vm480 = vmor %vm478, %vm479
    %v481 = vsel %vm480, %v473, %v477
    %v482 = vand.u32 2147483647, %v415
    %vm483 = vcmp.eq.f32.partialorder %v482, 8.507059e+37
    %v484 = vand.u32 %v415, 2147483648
    %v485 = vor.u32 1.1754944e-38, %v484
    %v486 = vsel %vm483, %v485, %v481
    %v487 = vmul.f32 1.0, %v486
    %v488 = vrcp.pop %v416
    %v489 = vmul.f32 %v416, %v488
    %v490 = vsub.f32 1.0, %v489
    %v491 = vmul.f32 %v488, %v490
    %v492 = vadd.f32 %v488, %v491
    %vm493 = vweird.f32 %v416
    %vm494 = vweird.f32 %v488
    %vm495 = vmor %vm493, %vm494
    %v496 = vsel %vm495, %v488, %v492
    %v497 = vand.u32 2147483647, %v416
    %vm498 = vcmp.eq.f32.partialorder %v497, 8.507059e+37
    %v499 = vand.u32 %v416, 2147483648
    %v500 = vor.u32 1.1754944e-38, %v499
    %v501 = vsel %vm498, %v500, %v496
    %v502 = vmul.f32 1.0, %v501
    %v503 = vrcp.pop %v417
    %v504 = vmul.f32 %v417, %v503
    %v505 = vsub.f32 1.0, %v504
    %v506 = vmul.f32 %v503, %v505
    %v507 = vadd.f32 %v503, %v506
    %vm508 = vweird.f32 %v417
    %vm509 = vweird.f32 %v503
    %vm510 = vmor %vm508, %vm509
    %v511 = vsel %vm510, %v503, %v507
    %v512 = vand.u32 2147483647, %v417
    %vm513 = vcmp.eq.f32.partialorder %v512, 8.507059e+37
    %v514 = vand.u32 %v417, 2147483648
    %v515 = vor.u32 1.1754944e-38, %v514
    %v516 = vsel %vm513, %v515, %v511
    %v517 = vmul.f32 1.0, %v516
    %v518 = vrcp.pop %v418
    %v519 = vmul.f32 %v418, %v518
    %v520 = vsub.f32 1.0, %v519
    %v521 = vmul.f32 %v518, %v520
    %v522 = vadd.f32 %v518, %v521
    %vm523 = vweird.f32 %v418
    %vm524 = vweird.f32 %v518
    %vm525 = vmor %vm523, %vm524
    %v526 = vsel %vm525, %v518, %v522
    %v527 = vand.u32 2147483647, %v418
    %vm528 = vcmp.eq.f32.partialorder %v527, 8.507059e+37
    %v529 = vand.u32 %v418, 2147483648
    %v530 = vor.u32 1.1754944e-38, %v529
    %v531 = vsel %vm528, %v530, %v526
    %v532 = vmul.f32 1.0, %v531
    %v533 = vrcp.pop %v419
    %v534 = vmul.f32 %v419, %v533
    %v535 = vsub.f32 1.0, %v534
    %v536 = vmul.f32 %v533, %v535
    %v537 = vadd.f32 %v533, %v536
    %vm538 = vweird.f32 %v419
    %vm539 = vweird.f32 %v533
    %vm540 = vmor %vm538, %vm539
    %v541 = vsel %vm540, %v533, %v537
    %v542 = vand.u32 2147483647, %v419
    %vm543 = vcmp.eq.f32.partialorder %v542, 8.507059e+37
    %v544 = vand.u32 %v419, 2147483648
    %v545 = vor.u32 1.1754944e-38, %v544
    %v546 = vsel %vm543, %v545, %v541
    %v547 = vmul.f32 1.0, %v546
    %v548 = vrcp.pop %v420
    %v549 = vmul.f32 %v420, %v548
    %v550 = vsub.f32 1.0, %v549
    %v551 = vmul.f32 %v548, %v550
    %v552 = vadd.f32 %v548, %v551
    %vm553 = vweird.f32 %v420
    %vm554 = vweird.f32 %v548
    %vm555 = vmor %vm553, %vm554
    %v556 = vsel %vm555, %v548, %v552
    %v557 = vand.u32 2147483647, %v420
    %vm558 = vcmp.eq.f32.partialorder %v557, 8.507059e+37
    %v559 = vand.u32 %v420, 2147483648
    %v560 = vor.u32 1.1754944e-38, %v559
    %v561 = vsel %vm558, %v560, %v556
    %v562 = vmul.f32 1.0, %v561
    %v563 = vrcp.pop %v421
    %v564 = vmul.f32 %v421, %v563
    %v565 = vsub.f32 1.0, %v564
    %v566 = vmul.f32 %v563, %v565
    %v567 = vadd.f32 %v563, %v566
    %vm568 = vweird.f32 %v421
    %vm569 = vweird.f32 %v563
    %vm570 = vmor %vm568, %vm569
    %v571 = vsel %vm570, %v563, %v567
    %v572 = vand.u32 2147483647, %v421
    %vm573 = vcmp.eq.f32.partialorder %v572, 8.507059e+37
    %v574 = vand.u32 %v421, 2147483648
    %v575 = vor.u32 1.1754944e-38, %v574
    %v576 = vsel %vm573, %v575, %v571
    %v577 = vmul.f32 1.0, %v576
    %v578 = vrcp.pop %v422
    %v579 = vmul.f32 %v422, %v578
    %v580 = vsub.f32 1.0, %v579
    %v581 = vmul.f32 %v578, %v580
    %v582 = vadd.f32 %v578, %v581
    %vm583 = vweird.f32 %v422
    %vm584 = vweird.f32 %v578
    %vm585 = vmor %vm583, %vm584
    %v586 = vsel %vm585, %v578, %v582
    %v587 = vand.u32 2147483647, %v422
    %vm588 = vcmp.eq.f32.partialorder %v587, 8.507059e+37
    %v589 = vand.u32 %v422, 2147483648
    %v590 = vor.u32 1.1754944e-38, %v589
    %v591 = vsel %vm588, %v590, %v586
    %v592 = vmul.f32 1.0, %v591
    %v593 = vrcp.pop %v423
    %v594 = vmul.f32 %v423, %v593
    %v595 = vsub.f32 1.0, %v594
    %v596 = vmul.f32 %v593, %v595
    %v597 = vadd.f32 %v593, %v596
    %vm598 = vweird.f32 %v423
    %vm599 = vweird.f32 %v593
    %vm600 = vmor %vm598, %vm599
    %v601 = vsel %vm600, %v593, %v597
    %v602 = vand.u32 2147483647, %v423
    %vm603 = vcmp.eq.f32.partialorder %v602, 8.507059e+37
    %v604 = vand.u32 %v423, 2147483648
    %v605 = vor.u32 1.1754944e-38, %v604
    %v606 = vsel %vm603, %v605, %v601
    %v607 = vmul.f32 1.0, %v606
    %v608 = vrcp.pop %v424
    %v609 = vmul.f32 %v424, %v608
    %v610 = vsub.f32 1.0, %v609
    %v611 = vmul.f32 %v608, %v610
    %v612 = vadd.f32 %v608, %v611
    %vm613 = vweird.f32 %v424
    %vm614 = vweird.f32 %v608
    %vm615 = vmor %vm613, %vm614
    %v616 = vsel %vm615, %v608, %v612
    %v617 = vand.u32 2147483647, %v424
    %vm618 = vcmp.eq.f32.partialorder %v617, 8.507059e+37
    %v619 = vand.u32 %v424, 2147483648
    %v620 = vor.u32 1.1754944e-38, %v619
    %v621 = vsel %vm618, %v620, %v616
    %v622 = vmul.f32 1.0, %v621
    %v623 = vrcp.pop %v425
    %v624 = vmul.f32 %v425, %v623
    %v625 = vsub.f32 1.0, %v624
    %v626 = vmul.f32 %v623, %v625
    %v627 = vadd.f32 %v623, %v626
    %vm628 = vweird.f32 %v425
    %vm629 = vweird.f32 %v623
    %vm630 = vmor %vm628, %vm629
    %v631 = vsel %vm630, %v623, %v627
    %v632 = vand.u32 2147483647, %v425
    %vm633 = vcmp.eq.f32.partialorder %v632, 8.507059e+37
    %v634 = vand.u32 %v425, 2147483648
    %v635 = vor.u32 1.1754944e-38, %v634
    %v636 = vsel %vm633, %v635, %v631
    %v637 = vmul.f32 1.0, %v636
    %v638 = vrcp.pop %v426
    %v639 = vmul.f32 %v426, %v638
    %v640 = vsub.f32 1.0, %v639
    %v641 = vmul.f32 %v638, %v640
    %v642 = vadd.f32 %v638, %v641
    %vm643 = vweird.f32 %v426
    %vm644 = vweird.f32 %v638
    %vm645 = vmor %vm643, %vm644
    %v646 = vsel %vm645, %v638, %v642
    %v647 = vand.u32 2147483647, %v426
    %vm648 = vcmp.eq.f32.partialorder %v647, 8.507059e+37
    %v649 = vand.u32 %v426, 2147483648
    %v650 = vor.u32 1.1754944e-38, %v649
    %v651 = vsel %vm648, %v650, %v646
    %v652 = vmul.f32 1.0, %v651
    %v653 = vrcp.pop %v427
    %v654 = vmul.f32 %v427, %v653
    %v655 = vsub.f32 1.0, %v654
    %v656 = vmul.f32 %v653, %v655
    %v657 = vadd.f32 %v653, %v656
    %vm658 = vweird.f32 %v427
    %vm659 = vweird.f32 %v653
    %vm660 = vmor %vm658, %vm659
    %v661 = vsel %vm660, %v653, %v657
    %v662 = vand.u32 2147483647, %v427
    %vm663 = vcmp.eq.f32.partialorder %v662, 8.507059e+37
    %v664 = vand.u32 %v427, 2147483648
    %v665 = vor.u32 1.1754944e-38, %v664
    %v666 = vsel %vm663, %v665, %v661
    %v667 = vmul.f32 1.0, %v666
    %v668 = vmul.f32 %v348, %v442
    %v669 = vmul.f32 %v349, %v457
    %v670 = vmul.f32 %v350, %v472
    %v671 = vmul.f32 %v351, %v487
    %v672 = vmul.f32 %v352, %v502
    %v673 = vmul.f32 %v353, %v517
    %v674 = vmul.f32 %v354, %v532
    %v675 = vmul.f32 %v355, %v547
    %v676 = vmul.f32 %v356, %v562
    %v677 = vmul.f32 %v357, %v577
    %v678 = vmul.f32 %v358, %v592
    %v679 = vmul.f32 %v359, %v607
    %v680 = vmul.f32 %v360, %v622
    %v681 = vmul.f32 %v361, %v637
    %v682 = vmul.f32 %v362, %v652
    %v683 = vmul.f32 %v363, %v667
    %v684 = vpack.c.bf16 %v668, %v668
    %v685 = vpack.c.bf16 %v669, %v669
    %v686 = vpack.c.bf16 %v670, %v670
    %v687 = vpack.c.bf16 %v671, %v671
    %v688 = vpack.c.bf16 %v672, %v672
    %v689 = vpack.c.bf16 %v673, %v673
    %v690 = vpack.c.bf16 %v674, %v674
    %v691 = vpack.c.bf16 %v675, %v675
    %v692 = vpack.c.bf16 %v676, %v676
    %v693 = vpack.c.bf16 %v677, %v677
    %v694 = vpack.c.bf16 %v678, %v678
    %v695 = vpack.c.bf16 %v679, %v679
    %v696 = vpack.c.bf16 %v680, %v680
    %v697 = vpack.c.bf16 %v681, %v681
    %v698 = vpack.c.bf16 %v682, %v682
    %v699 = vpack.c.bf16 %v683, %v683
    %v700 = vperm.slane %v27, 4
    %v701 = vperm.slane %v28, 4
    %v718 = vunpack.c.l.b16 %v684
    %v719 = vunpack.c.l.b16 %v685
    %v720 = vunpack.c.l.b16 %v686
    %v721 = vunpack.c.l.b16 %v687
    %v722 = vunpack.c.l.b16 %v688
    %v723 = vunpack.c.l.b16 %v689
    %v724 = vunpack.c.l.b16 %v690
    %v725 = vunpack.c.l.b16 %v691
    %v726 = vunpack.c.l.b16 %v692
    %v727 = vunpack.c.l.b16 %v693
    %v728 = vunpack.c.l.b16 %v694
    %v729 = vunpack.c.l.b16 %v695
    %v730 = vunpack.c.l.b16 %v696
    %v731 = vunpack.c.l.b16 %v697
    %v732 = vunpack.c.l.b16 %v698
    %v733 = vunpack.c.l.b16 %v699
    %v734 = vrot.slane %v719, 7
    %vm735 = vcmask 1041409
    %v736 = vsel %vm735, %v734, %v718
    %v737 = vrot.slane %v720, 6
    %vm738 = vcmask 1042434
    %v739 = vsel %vm738, %v737, %v736
    %v740 = vrot.slane %v721, 5
    %vm741 = vcmask 1043459
    %v742 = vsel %vm741, %v740, %v739
    %v743 = vrot.slane %v722, 4
    %vm744 = vcmask 1044484
    %v745 = vsel %vm744, %v743, %v742
    %v746 = vrot.slane %v723, 3
    %vm747 = vcmask 1045509
    %v748 = vsel %vm747, %v746, %v745
    %v749 = vrot.slane %v724, 2
    %vm750 = vcmask 1046534
    %v751 = vsel %vm750, %v749, %v748
    %v752 = vrot.slane %v725, 1
    %vm753 = vcmask 1047559
    %v754 = vsel %vm753, %v752, %v751
    %v755 = vrot.slane %v727, 7
    %v756 = vsel %vm735, %v755, %v726
    %v757 = vrot.slane %v728, 6
    %v758 = vsel %vm738, %v757, %v756
    %v759 = vrot.slane %v729, 5
    %v760 = vsel %vm741, %v759, %v758
    %v761 = vrot.slane %v730, 4
    %v762 = vsel %vm744, %v761, %v760
    %v763 = vrot.slane %v731, 3
    %v764 = vsel %vm747, %v763, %v762
    %v765 = vrot.slane %v732, 2
    %v766 = vsel %vm750, %v765, %v764
    %v767 = vrot.slane %v733, 1
    %v768 = vsel %vm753, %v767, %v766
    %v769 = vpack.c.b16 %v768, %v754
    %v770 = vunpack.c.h.b16 %v30
    %v771 = vunpack.c.h.b16 %v32
    %v772 = vunpack.c.h.b16 %v34
    %v773 = vunpack.c.h.b16 %v36
    %v774 = vpack.c.b16 %v771, %v770
    %v775 = vpack.c.b16 %v773, %v772
    %776 = vrot.lane.b32.xlu0 %v116, 64
    %v777 = vpop.permute.xlu0 %776
    %778 = vrot.lane.b32.xlu0 %v774, 64
    %v779 = vpop.permute.xlu0 %778
    %780 = vrot.lane.b32.xlu0 %v117, 64
    %v781 = vpop.permute.xlu0 %780
    %782 = vrot.lane.b32.xlu0 %v775, 64
    %v783 = vpop.permute.xlu0 %782
    %vm784 = vcmask 523264
    %v785 = vsel %vm784, %v777, %v779
    %v786 = vsel %vm784, %v781, %v783
    %v792 = vsel %vm48, %v769, 0
    %794 = vmatpush.bf16.msra.mxu0 0
    %795 = vmatpush.bf16.msra.mxu0 0
    %796 = vmatpush.bf16.msra.mxu0 0
    %797 = vmatpush.bf16.msra.mxu0 0
    %798 = vmatpush.bf16.msra.mxu0 0
    %799 = vmatpush.bf16.msra.mxu0 0
    %800 = vmatpush.bf16.msra.mxu0 %v786
    %801 = vmatpush.bf16.msra.mxu0 %v785
    %802 = vmatmul.bf16.gmra.mxu0 %v792
    %v803 = vpop.f32.mrf.mxu0
    %v804 = vadd.f32 %v700, %v803
    %v805 = vpop.f32.mrf.mxu0
    %v806 = vadd.f32 %v700, %v805
    %807 = vdwg.mxu0
    %808 = vmatpush.bf16.msra.mxu0 0
    %809 = vmatpush.bf16.msra.mxu0 0
    %810 = vmatpush.bf16.msra.mxu0 0
    %811 = vmatpush.bf16.msra.mxu0 0
    %812 = vmatpush.bf16.msra.mxu0 0
    %813 = vmatpush.bf16.msra.mxu0 0
    %814 = vmatpush.bf16.msra.mxu0 %v783
    %815 = vmatpush.bf16.msra.mxu0 %v779
    %816 = vmatmul.bf16.gmra.mxu0 %v792
    %v817 = vpop.f32.mrf.mxu0
    %v818 = vadd.f32 %v701, %v817
    %v819 = vpop.f32.mrf.mxu0
    %v820 = vadd.f32 %v701, %v819
    %821 = vdwg.mxu0
    %v822 = vsub.f32 0.0, %v804
    %v823 = vsub.f32 0.0, %v806
    %v824 = vmul.f32 %v822, 1.442695
    %v825 = vpow.pop %v824
    %v826 = vmul.f32 %v823, 1.442695
    %v827 = vpow.pop %v826
    %v828 = vadd.f32 %v825, 1.0
    %v829 = vadd.f32 %v827, 1.0
    %v830 = vrcp.pop %v828
    %v831 = vmul.f32 %v828, %v830
    %v832 = vsub.f32 1.0, %v831
    %v833 = vmul.f32 %v830, %v832
    %v834 = vadd.f32 %v830, %v833
    %vm835 = vweird.f32 %v828
    %vm836 = vweird.f32 %v830
    %vm837 = vmor %vm835, %vm836
    %v838 = vsel %vm837, %v830, %v834
    %v839 = vand.u32 2147483647, %v828
    %vm840 = vcmp.eq.f32.partialorder %v839, 8.507059e+37
    %v841 = vand.u32 %v828, 2147483648
    %v842 = vor.u32 1.1754944e-38, %v841
    %v843 = vsel %vm840, %v842, %v838
    %v844 = vmul.f32 1.0, %v843
    %v845 = vrcp.pop %v829
    %v846 = vmul.f32 %v829, %v845
    %v847 = vsub.f32 1.0, %v846
    %v848 = vmul.f32 %v845, %v847
    %v849 = vadd.f32 %v845, %v848
    %vm850 = vweird.f32 %v829
    %vm851 = vweird.f32 %v845
    %vm852 = vmor %vm850, %vm851
    %v853 = vsel %vm852, %v845, %v849
    %v854 = vand.u32 2147483647, %v829
    %vm855 = vcmp.eq.f32.partialorder %v854, 8.507059e+37
    %v856 = vand.u32 %v829, 2147483648
    %v857 = vor.u32 1.1754944e-38, %v856
    %v858 = vsel %vm855, %v857, %v853
    %v859 = vmul.f32 1.0, %v858
    %v860 = vmul.f32 %v804, %v844
    %v861 = vmul.f32 %v806, %v859
    %v862 = vperm.slane %v27, 5
    %864 = vrot.lane.b32.xlu0 %v862, 32
    %v865 = vpop.permute.xlu0 %864
    %v867 = vmul.f32 %v860, %v865
    %v868 = vmul.f32 %v861, %v865
    %v869 = vperm.slane %v27, 7
    %871 = vrot.lane.b32.xlu0 %v869, 32
    %v872 = vpop.permute.xlu0 %871
    %v874 = vadd.f32 %v867, %v872
    %v875 = vadd.f32 %v868, %v872
    %v876 = vmul.f32 %v874, 0.25
    %v877 = vmul.f32 %v875, 0.25
    %v878 = vpack.c.bf16 %v876, %v876
    %v879 = vpack.c.bf16 %v877, %v877
    %v880 = vperm.slane %v27, 6
    %882 = vrot.lane.b32.xlu0 %v880, 32
    %v883 = vpop.permute.xlu0 %882
    %v885 = vmul.f32 %v860, %v883
    %v886 = vmul.f32 %v861, %v883
    %v887 = vperm.slane %v29, 0
    %889 = vrot.lane.b32.xlu0 %v887, 32
    %v890 = vpop.permute.xlu0 %889
    %v892 = vadd.f32 %v885, %v890
    %v893 = vadd.f32 %v886, %v890
    %v894 = vpack.c.bf16 %v892, %v892
    %v895 = vpack.c.bf16 %v893, %v893
    %v896 = vld [vmem:[%s3] sm:$0xff]
    %v898 = vunpack.c.l.b16 %v878
    %v899 = vpack.c.b16 %v898, %v898
    %900 = vrot.lane.b32.xlu0 %v899, 96
    %v901 = vpop.permute.xlu0 %900
    %v903 = vunpack.c.l.b16 %v894
    %v904 = vpack.c.b16 %v903, %v903
    %905 = vrot.lane.b32.xlu0 %v904, 96
    %v906 = vpop.permute.xlu0 %905
    %vm907 = vcmask 130048
    %v909 = vsel %vm907, %v901, 0
    %v912 = vsel %vm907, %v906, 0
    %914 = vmatpush.bf16.xpose.msra.mxu0 0
    %915 = vmatpush.bf16.xpose.msra.mxu0 0
    %916 = vmatpush.bf16.xpose.msra.mxu0 0
    %917 = vmatpush.bf16.xpose.msra.mxu0 0
    %918 = vmatpush.bf16.xpose.msra.mxu0 0
    %919 = vmatpush.bf16.xpose.msra.mxu0 0
    %920 = vmatpush.bf16.xpose.msra.mxu0 0
    %921 = vmatpush.bf16.xpose.msra.mxu0 %v912
    %922 = vmatmul.bf16.gmra.mxu0 %v909
    %v923 = vpop.f32.mrf.mxu0
    %v924 = vadd.f32 %v896, %v923
    %v925 = vpop.f32.mrf.mxu0
    %926 = vdwg.mxu0
    %v928 = vunpack.c.l.b16 %v879
    %v929 = vpack.c.b16 %v928, %v928
    %930 = vrot.lane.b32.xlu0 %v929, 96
    %v931 = vpop.permute.xlu0 %930
    %v933 = vunpack.c.l.b16 %v895
    %v934 = vpack.c.b16 %v933, %v933
    %935 = vrot.lane.b32.xlu0 %v934, 96
    %v936 = vpop.permute.xlu0 %935
    %v938 = vsel %vm907, %v931, 0
    %v941 = vsel %vm907, %v936, 0
    %943 = vmatpush.bf16.xpose.msra.mxu0 0
    %944 = vmatpush.bf16.xpose.msra.mxu0 0
    %945 = vmatpush.bf16.xpose.msra.mxu0 0
    %946 = vmatpush.bf16.xpose.msra.mxu0 0
    %947 = vmatpush.bf16.xpose.msra.mxu0 0
    %948 = vmatpush.bf16.xpose.msra.mxu0 0
    %949 = vmatpush.bf16.xpose.msra.mxu0 0
    %950 = vmatpush.bf16.xpose.msra.mxu0 %v941
    %951 = vmatmul.bf16.gmra.mxu0 %v938
    %v952 = vpop.f32.mrf.mxu0
    %v953 = vadd.f32 %v896, %v952
    %v954 = vpop.f32.mrf.mxu0
    %955 = vdwg.mxu0
    %vm956 = vcmask 64512
    %v957 = vsel %vm956, %v924, -inf
    %958 = vmax.xlane.f32.xlu0 %v957
    %v959 = vpop.xlane.xlu0 %958
    %v960 = vsel %vm956, %v953, -inf
    %961 = vmax.xlane.f32.xlu0 %v960
    %v962 = vpop.xlane.xlu0 %961
    %v963 = vsub.f32 %v924, %v959
    %v964 = vsub.f32 %v953, %v962
    %v965 = vmul.f32 %v963, 1.442695
    %v966 = vpow.pop %v965
    %v967 = vmul.f32 %v964, 1.442695
    %v968 = vpow.pop %v967
    %v969 = vsel %vm956, %v966, 0.0
    %970 = vadd.xlane.f32.xlu0 %v969
    %v971 = vpop.xlane.xlu0 %970
    %v972 = vsel %vm956, %v968, 0.0
    %973 = vadd.xlane.f32.xlu0 %v972
    %v974 = vpop.xlane.xlu0 %973
    %v975 = vrcp.pop %v971
    %v976 = vmul.f32 %v971, %v975
    %v977 = vsub.f32 1.0, %v976
    %v978 = vmul.f32 %v975, %v977
    %v979 = vadd.f32 %v975, %v978
    %vm980 = vweird.f32 %v971
    %vm981 = vweird.f32 %v975
    %vm982 = vmor %vm980, %vm981
    %v983 = vsel %vm982, %v975, %v979
    %v984 = vand.u32 2147483647, %v971
    %vm985 = vcmp.eq.f32.partialorder %v984, 8.507059e+37
    %v986 = vand.u32 %v971, 2147483648
    %v987 = vor.u32 1.1754944e-38, %v986
    %v988 = vsel %vm985, %v987, %v983
    %v989 = vrcp.pop %v974
    %v990 = vmul.f32 %v974, %v989
    %v991 = vsub.f32 1.0, %v990
    %v992 = vmul.f32 %v989, %v991
    %v993 = vadd.f32 %v989, %v992
    %vm994 = vweird.f32 %v974
    %vm995 = vweird.f32 %v989
    %vm996 = vmor %vm994, %vm995
    %v997 = vsel %vm996, %v989, %v993
    %v998 = vand.u32 2147483647, %v974
    %vm999 = vcmp.eq.f32.partialorder %v998, 8.507059e+37
    %v1000 = vand.u32 %v974, 2147483648
    %v1001 = vor.u32 1.1754944e-38, %v1000
    %v1002 = vsel %vm999, %v1001, %v997
    %v1003 = vmul.f32 %v966, %v988
    %v1004 = vmul.f32 %v968, %v1002
    %v1005 = vpack.c.bf16 %v1003, %v1003
    %v1006 = vpack.c.bf16 %v1004, %v1004
    %v1007 = vpack.c.bf16 %v175, %v175
    %v1008 = vpack.c.bf16 %v176, %v176
    %v1010 = vsel %vm956, %v1005, 0
    %vm1012 = vcmask 1043456
    %v1014 = vsel %vm1012, %v1007, 0
    %1016 = vmatpush.bf16.msra.mxu0 0
    %1017 = vmatpush.bf16.msra.mxu0 0
    %1018 = vmatpush.bf16.msra.mxu0 0
    %1019 = vmatpush.bf16.msra.mxu0 0
    %1020 = vmatpush.bf16.msra.mxu0 0
    %1021 = vmatpush.bf16.msra.mxu0 0
    %1022 = vmatpush.bf16.msra.mxu0 0
    %1023 = vmatpush.bf16.msra.mxu0 %v1014
    %1024 = vmatmul.bf16.gmra.mxu0 %v1010
    %v1025 = vpop.f32.mrf.mxu0
    %v1026 = vadd.f32 0.0, %v1025
    %v1027 = vpop.f32.mrf.mxu0
    %1028 = vdwg.mxu0
    %v1030 = vsel %vm956, %v1006, 0
    %v1033 = vsel %vm1012, %v1008, 0
    %1035 = vmatpush.bf16.msra.mxu0 0
    %1036 = vmatpush.bf16.msra.mxu0 0
    %1037 = vmatpush.bf16.msra.mxu0 0
    %1038 = vmatpush.bf16.msra.mxu0 0
    %1039 = vmatpush.bf16.msra.mxu0 0
    %1040 = vmatpush.bf16.msra.mxu0 0
    %1041 = vmatpush.bf16.msra.mxu0 0
    %1042 = vmatpush.bf16.msra.mxu0 %v1033
    %1043 = vmatmul.bf16.gmra.mxu0 %v1030
    %v1044 = vpop.f32.mrf.mxu0
    %v1045 = vadd.f32 0.0, %v1044
    %v1046 = vpop.f32.mrf.mxu0
    %1047 = vdwg.mxu0
    %1050 = vrot.lane.b32.xlu0 %v860, 80
    %v1051 = vpop.permute.xlu0 %1050
    %1052 = vrot.lane.b32.xlu0 %v861, 80
    %v1053 = vpop.permute.xlu0 %1052
    %v1056 = vmul.f32 %v1026, %v1051
    %v1057 = vmul.f32 %v1045, %v1053
    %v1058 = vpack.c.bf16 %v1057, %v1056
    %v1067 = vunpack.c.l.b16 %v38
    %v1068 = vunpack.c.l.b16 %v39
    %v1069 = vunpack.c.l.b16 %v40
    %v1070 = vunpack.c.l.b16 %v41
    %v1071 = vunpack.c.l.b16 %v42
    %v1072 = vunpack.c.l.b16 %v43
    %v1073 = vunpack.c.l.b16 %v44
    %v1074 = vunpack.c.l.b16 %v45
    %v1075 = vpack.c.b16 %v1068, %v1067
    %v1076 = vpack.c.b16 %v1070, %v1069
    %v1077 = vpack.c.b16 %v1072, %v1071
    %v1078 = vpack.c.b16 %v1074, %v1073
    %vm1083 = vcmask 523264
    %v1085 = vsel %vm1083, %v1058, 0
    %1087 = vmatpush.bf16.msra.mxu0 0
    %1088 = vmatpush.bf16.msra.mxu0 0
    %1089 = vmatpush.bf16.msra.mxu0 0
    %1090 = vmatpush.bf16.msra.mxu0 0
    %1091 = vmatpush.bf16.msra.mxu0 %v1078
    %1092 = vmatpush.bf16.msra.mxu0 %v1077
    %1093 = vmatpush.bf16.msra.mxu0 %v1076
    %1094 = vmatpush.bf16.msra.mxu0 %v1075
    %1095 = vmatmul.bf16.gmra.mxu0 %v1085
    %v1096 = vpop.f32.mrf.mxu0
    %v1097 = vadd.f32 0.0, %v1096
    %v1098 = vpop.f32.mrf.mxu0
    %v1099 = vadd.f32 0.0, %v1098
    %1100 = vdwg.mxu0
    %1103 = vrot.lane.b32.xlu0 %v1097, 112
    %v1104 = vpop.permute.xlu0 %1103
    %1105 = vrot.lane.b32.xlu0 %v1099, 112
    %v1106 = vpop.permute.xlu0 %1105
    %v1109 = vadd.f32 %v804, %v1104
    %v1110 = vadd.f32 %v818, %v1104
    %v1111 = vadd.f32 %v806, %v1106
    %v1112 = vadd.f32 %v820, %v1106
    %v1113 = vperm.slane %v29, 1
    %1115 = vrot.lane.b32.xlu0 %v1113, 112
    %v1116 = vpop.permute.xlu0 %1115
    %v1118 = vadd.f32 %v1109, %v1116
    %v1119 = vadd.f32 %v1110, %v1116
    %v1120 = vadd.f32 %v1111, %v1116
    %v1121 = vadd.f32 %v1112, %v1116
    %v1122 = vsub.f32 0.0, %v1118
    %v1123 = vsub.f32 0.0, %v1119
    %v1124 = vsub.f32 0.0, %v1120
    %v1125 = vsub.f32 0.0, %v1121
    %v1126 = vmul.f32 %v1122, 1.442695
    %v1127 = vpow.pop %v1126
    %v1128 = vmul.f32 %v1123, 1.442695
    %v1129 = vpow.pop %v1128
    %v1130 = vmul.f32 %v1124, 1.442695
    %v1131 = vpow.pop %v1130
    %v1132 = vmul.f32 %v1125, 1.442695
    %v1133 = vpow.pop %v1132
    %v1134 = vadd.f32 %v1127, 1.0
    %v1135 = vadd.f32 %v1129, 1.0
    %v1136 = vadd.f32 %v1131, 1.0
    %v1137 = vadd.f32 %v1133, 1.0
    %v1138 = vrcp.pop %v1134
    %v1139 = vmul.f32 %v1134, %v1138
    %v1140 = vsub.f32 1.0, %v1139
    %v1141 = vmul.f32 %v1138, %v1140
    %v1142 = vadd.f32 %v1138, %v1141
    %vm1143 = vweird.f32 %v1134
    %vm1144 = vweird.f32 %v1138
    %vm1145 = vmor %vm1143, %vm1144
    %v1146 = vsel %vm1145, %v1138, %v1142
    %v1147 = vand.u32 2147483647, %v1134
    %vm1148 = vcmp.eq.f32.partialorder %v1147, 8.507059e+37
    %v1149 = vand.u32 %v1134, 2147483648
    %v1150 = vor.u32 1.1754944e-38, %v1149
    %v1151 = vsel %vm1148, %v1150, %v1146
    %v1152 = vmul.f32 1.0, %v1151
    %v1153 = vrcp.pop %v1135
    %v1154 = vmul.f32 %v1135, %v1153
    %v1155 = vsub.f32 1.0, %v1154
    %v1156 = vmul.f32 %v1153, %v1155
    %v1157 = vadd.f32 %v1153, %v1156
    %vm1158 = vweird.f32 %v1135
    %vm1159 = vweird.f32 %v1153
    %vm1160 = vmor %vm1158, %vm1159
    %v1161 = vsel %vm1160, %v1153, %v1157
    %v1162 = vand.u32 2147483647, %v1135
    %vm1163 = vcmp.eq.f32.partialorder %v1162, 8.507059e+37
    %v1164 = vand.u32 %v1135, 2147483648
    %v1165 = vor.u32 1.1754944e-38, %v1164
    %v1166 = vsel %vm1163, %v1165, %v1161
    %v1167 = vmul.f32 1.0, %v1166
    %v1168 = vrcp.pop %v1136
    %v1169 = vmul.f32 %v1136, %v1168
    %v1170 = vsub.f32 1.0, %v1169
    %v1171 = vmul.f32 %v1168, %v1170
    %v1172 = vadd.f32 %v1168, %v1171
    %vm1173 = vweird.f32 %v1136
    %vm1174 = vweird.f32 %v1168
    %vm1175 = vmor %vm1173, %vm1174
    %v1176 = vsel %vm1175, %v1168, %v1172
    %v1177 = vand.u32 2147483647, %v1136
    %vm1178 = vcmp.eq.f32.partialorder %v1177, 8.507059e+37
    %v1179 = vand.u32 %v1136, 2147483648
    %v1180 = vor.u32 1.1754944e-38, %v1179
    %v1181 = vsel %vm1178, %v1180, %v1176
    %v1182 = vmul.f32 1.0, %v1181
    %v1183 = vrcp.pop %v1137
    %v1184 = vmul.f32 %v1137, %v1183
    %v1185 = vsub.f32 1.0, %v1184
    %v1186 = vmul.f32 %v1183, %v1185
    %v1187 = vadd.f32 %v1183, %v1186
    %vm1188 = vweird.f32 %v1137
    %vm1189 = vweird.f32 %v1183
    %vm1190 = vmor %vm1188, %vm1189
    %v1191 = vsel %vm1190, %v1183, %v1187
    %v1192 = vand.u32 2147483647, %v1137
    %vm1193 = vcmp.eq.f32.partialorder %v1192, 8.507059e+37
    %v1194 = vand.u32 %v1137, 2147483648
    %v1195 = vor.u32 1.1754944e-38, %v1194
    %v1196 = vsel %vm1193, %v1195, %v1191
    %v1197 = vmul.f32 1.0, %v1196
    %v1198 = vmul.f32 %v1118, %v1152
    %v1199 = vmul.f32 %v1119, %v1167
    %v1200 = vmul.f32 %v1120, %v1182
    %v1201 = vmul.f32 %v1121, %v1197
    %1204 = vrot.lane.b32.xlu0 %v46, 112
    %v1205 = vpop.permute.xlu0 %1204
    %1206 = vrot.lane.b32.xlu0 %v47, 112
    %v1207 = vpop.permute.xlu0 %1206
    %v1210 = vsub.f32 %v1198, %v1205
    %v1211 = vsub.f32 %v1199, %v1205
    %v1212 = vsub.f32 %v1200, %v1207
    %v1213 = vsub.f32 %v1201, %v1207
    %1218 = vrot.lane.b32.xlu0 %v1210, 16
    %v1219 = vpop.permute.xlu0 %1218
    %1220 = vrot.lane.b32.xlu0 %v1211, 16
    %v1221 = vpop.permute.xlu0 %1220
    %1222 = vrot.lane.b32.xlu0 %v1212, 16
    %v1223 = vpop.permute.xlu0 %1222
    %1224 = vrot.lane.b32.xlu0 %v1213, 16
    %v1225 = vpop.permute.xlu0 %1224
    %v1226 = vsel %vm907, %v1219, %v1221
    %v1227 = vsel %vm907, %v1223, %v1225
    %v1230 = vmul.f32 %v844, %v1226
    %v1231 = vmul.f32 %v859, %v1227
    %v1232 = vadd.f32 %v46, %v1230
    %v1233 = vadd.f32 %v47, %v1231
    %v1234 = vsel %vm48, %v1232, 0.0
    %1235 = vadd.xlane.f32.xlu0 %v1234
    %v1236 = vpop.xlane.xlu0 %1235
    %v1237 = vsel %vm48, %v1233, 0.0
    %1238 = vadd.xlane.f32.xlu0 %v1237
    %v1239 = vpop.xlane.xlu0 %1238
    %v1240 = vmul.f32 %v1236, %v61
    %v1241 = vmul.f32 %v1239, %v61
    %v1242 = vsub.f32 %v1232, %v1240
    %v1243 = vsub.f32 %v1233, %v1241
    %v1244 = vmul.f32 %v1242, %v1242
    %v1245 = vmul.f32 %v1243, %v1243
    %v1246 = vsel %vm48, %v1244, 0.0
    %1247 = vadd.xlane.f32.xlu0 %v1246
    %v1248 = vpop.xlane.xlu0 %1247
    %v1249 = vsel %vm48, %v1245, 0.0
    %1250 = vadd.xlane.f32.xlu0 %v1249
    %v1251 = vpop.xlane.xlu0 %1250
    %v1252 = vmul.f32 %v1248, %v61
    %v1253 = vmul.f32 %v1251, %v61
    %v1254 = vadd.f32 %v1252, 1e-05
    %v1255 = vadd.f32 %v1253, 1e-05
    %v1256 = vrsqrt.pop %v1254
    %v1257 = vmul.f32 %v1256, %v1254
    %v1258 = vmul.f32 %v1257, %v1256
    %v1259 = vmul.f32 0.5, %v1258
    %v1260 = vsub.f32 1.5, %v1259
    %v1261 = vmul.f32 %v1256, %v1260
    %vm1262 = vweird.f32 %v1254
    %vm1263 = vweird.f32 %v1256
    %vm1264 = vmor %vm1262, %vm1263
    %v1265 = vsel %vm1264, %v1256, %v1261
    %v1266 = vrsqrt.pop %v1255
    %v1267 = vmul.f32 %v1266, %v1255
    %v1268 = vmul.f32 %v1267, %v1266
    %v1269 = vmul.f32 0.5, %v1268
    %v1270 = vsub.f32 1.5, %v1269
    %v1271 = vmul.f32 %v1266, %v1270
    %vm1272 = vweird.f32 %v1255
    %vm1273 = vweird.f32 %v1266
    %vm1274 = vmor %vm1272, %vm1273
    %v1275 = vsel %vm1274, %v1266, %v1271
    %v1276 = vmul.f32 %v1242, %v1265
    %v1277 = vmul.f32 %v1243, %v1275
    %v1278 = vperm.slane %v29, 2
    %v1279 = vmul.f32 %v1276, %v1278
    %v1280 = vmul.f32 %v1277, %v1278
    %v1281 = vperm.slane %v29, 3
    %v1282 = vadd.f32 %v1279, %v1281
    %v1283 = vadd.f32 %v1280, %v1281
    %v1284 = vpack.c.bf16 %v1283, %v1282
    %v1285 = vperm.slane %v29, 4
    %v1290 = vunpack.c.l.b16 %v31
    %v1291 = vunpack.c.l.b16 %v33
    %v1292 = vunpack.c.l.b16 %v35
    %v1293 = vunpack.c.l.b16 %v37
    %v1294 = vpack.c.b16 %v1291, %v1290
    %v1295 = vpack.c.b16 %v1293, %v1292
    %1296 = vrot.lane.b32.xlu0 %v774, 48
    %v1297 = vpop.permute.xlu0 %1296
    %1298 = vrot.lane.b32.xlu0 %v1294, 48
    %v1299 = vpop.permute.xlu0 %1298
    %1300 = vrot.lane.b32.xlu0 %v775, 48
    %v1301 = vpop.permute.xlu0 %1300
    %1302 = vrot.lane.b32.xlu0 %v1295, 48
    %v1303 = vpop.permute.xlu0 %1302
    %vm1304 = vcmask 392192
    %v1305 = vsel %vm1304, %v1297, %v1299
    %v1306 = vsel %vm1304, %v1301, %v1303
    %v1310 = vsel %vm48, %v1284, 0
    %1312 = vmatpush.bf16.msra.mxu0 0
    %1313 = vmatpush.bf16.msra.mxu0 0
    %1314 = vmatpush.bf16.msra.mxu0 0
    %1315 = vmatpush.bf16.msra.mxu0 0
    %1316 = vmatpush.bf16.msra.mxu0 0
    %1317 = vmatpush.bf16.msra.mxu0 0
    %1318 = vmatpush.bf16.msra.mxu0 %v1306
    %1319 = vmatpush.bf16.msra.mxu0 %v1305
    %1320 = vmatmul.bf16.gmra.mxu0 %v1310
    %v1321 = vpop.f32.mrf.mxu0
    %v1322 = vadd.f32 %v1285, %v1321
    %v1323 = vpop.f32.mrf.mxu0
    %v1324 = vadd.f32 %v1285, %v1323
    %1325 = vdwg.mxu0
    %v1326 = vsub.f32 0.0, %v1322
    %v1327 = vsub.f32 0.0, %v1324
    %v1328 = vmul.f32 %v1326, 1.442695
    %v1329 = vpow.pop %v1328
    %v1330 = vmul.f32 %v1327, 1.442695
    %v1331 = vpow.pop %v1330
    %v1332 = vadd.f32 %v1329, 1.0
    %v1333 = vadd.f32 %v1331, 1.0
    %v1334 = vrcp.pop %v1332
    %v1335 = vmul.f32 %v1332, %v1334
    %v1336 = vsub.f32 1.0, %v1335
    %v1337 = vmul.f32 %v1334, %v1336
    %v1338 = vadd.f32 %v1334, %v1337
    %vm1339 = vweird.f32 %v1332
    %vm1340 = vweird.f32 %v1334
    %vm1341 = vmor %vm1339, %vm1340
    %v1342 = vsel %vm1341, %v1334, %v1338
    %v1343 = vand.u32 2147483647, %v1332
    %vm1344 = vcmp.eq.f32.partialorder %v1343, 8.507059e+37
    %v1345 = vand.u32 %v1332, 2147483648
    %v1346 = vor.u32 1.1754944e-38, %v1345
    %v1347 = vsel %vm1344, %v1346, %v1342
    %v1348 = vmul.f32 1.0, %v1347
    %v1349 = vrcp.pop %v1333
    %v1350 = vmul.f32 %v1333, %v1349
    %v1351 = vsub.f32 1.0, %v1350
    %v1352 = vmul.f32 %v1349, %v1351
    %v1353 = vadd.f32 %v1349, %v1352
    %vm1354 = vweird.f32 %v1333
    %vm1355 = vweird.f32 %v1349
    %vm1356 = vmor %vm1354, %vm1355
    %v1357 = vsel %vm1356, %v1349, %v1353
    %v1358 = vand.u32 2147483647, %v1333
    %vm1359 = vcmp.eq.f32.partialorder %v1358, 8.507059e+37
    %v1360 = vand.u32 %v1333, 2147483648
    %v1361 = vor.u32 1.1754944e-38, %v1360
    %v1362 = vsel %vm1359, %v1361, %v1357
    %v1363 = vmul.f32 1.0, %v1362
    %v1364 = vmul.f32 %v1322, %v1348
    %v1365 = vmul.f32 %v1324, %v1363
    %v1366 = vpack.c.bf16 %v1365, %v1364
    %v1367 = vperm.slane %v29, 5
    %1368 = vrot.lane.b32.xlu0 %v1075, 96
    %v1369 = vpop.permute.xlu0 %1368
    %1370 = vrot.lane.b32.xlu0 %v1076, 96
    %v1371 = vpop.permute.xlu0 %1370
    %1372 = vrot.lane.b32.xlu0 %v1077, 96
    %v1373 = vpop.permute.xlu0 %1372
    %1374 = vrot.lane.b32.xlu0 %v1078, 96
    %v1375 = vpop.permute.xlu0 %1374
    %v1381 = vsel %vm1083, %v1366, 0
    %1383 = vmatpush.bf16.msra.mxu0 0
    %1384 = vmatpush.bf16.msra.mxu0 0
    %1385 = vmatpush.bf16.msra.mxu0 0
    %1386 = vmatpush.bf16.msra.mxu0 0
    %1387 = vmatpush.bf16.msra.mxu0 %v1375
    %1388 = vmatpush.bf16.msra.mxu0 %v1373
    %1389 = vmatpush.bf16.msra.mxu0 %v1371
    %1390 = vmatpush.bf16.msra.mxu0 %v1369
    %1391 = vmatmul.bf16.gmra.mxu0 %v1381
    %v1392 = vpop.f32.mrf.mxu0
    %v1393 = vadd.f32 %v1367, %v1392
    %v1394 = vpop.f32.mrf.mxu0
    %v1395 = vadd.f32 %v1367, %v1394
    %1396 = vdwg.mxu0
    %v1397 = vadd.f32 %v1393, %v1232
    %v1398 = vadd.f32 %v1395, %v1233
    %1399 = vst.msk [vmem:[%s6] sm:$0xff] %vm48, %v1397
    %1400 = vst.msk [vmem:[%s6 + $0x8] sm:$0xff] %vm48, %v1398
    %1401 = vst.msk [vmem:[#allocation2] sm:$0xff] %vm956, %v1003
    %1402 = vst.msk [vmem:[#allocation2 + $0x8] sm:$0xff] %vm956, %v1004
    // Predicated region
    $region26: #{mega_sentence_encoder_layer.1} parent=1 // pred_check
      _
    $region27: #{mega_sentence_encoder_layer.1} parent=1 // pred_check_branch
      %1404 = sbr.rel (0) target = $region29
    $region28: #{mega_sentence_encoder_layer.1} parent=1 // pred_region
      _
    $region29: #{mega_sentence_encoder_layer.1} parent=1 // pred_fallthru
      _
    // Predicated region
    $region30: #{mega_sentence_encoder_layer.1} parent=1 // pred_check
      _
    $region31: #{mega_sentence_encoder_layer.1} parent=1 // pred_check_branch
      %1406 = sbr.rel (0) target = $region33
    $region32: #{mega_sentence_encoder_layer.1} parent=1 // pred_region
      %1408 = vsyncadd [#allocation3], 0
      %s1409 = sshll.u32 [#allocation2], 4
      %s1410 = int_to_ptr.vmem [resolvable:$true] %s1409
      %s1411 = sshll.u32 %s7, 4
      %s1412 = int_to_ptr.hbm [resolvable:$true] %s1411
      %1417 = dma.vmem_to_hbm [thread:$0]  %s1410, 256, %s1412, [#allocation3], 128, 128, 8
    $region33: #{mega_sentence_encoder_layer.1} parent=1 // pred_fallthru
      _
    // Predicated region
    $region34: #{mega_sentence_encoder_layer.1} parent=1 // pred_check
      _
    $region35: #{mega_sentence_encoder_layer.1} parent=1 // pred_check_branch
      %1419 = sbr.rel (0) target = $region37
    $region36: #{mega_sentence_encoder_layer.1} parent=1 // pred_region
      _
    $region37: #{mega_sentence_encoder_layer.1} parent=1 // pred_fallthru
      _
    // Predicated region
    $region38: #{mega_sentence_encoder_layer.1} parent=1 // pred_check
      _
    $region39: #{mega_sentence_encoder_layer.1} parent=1 // pred_check_branch
      %1421 = sbr.rel (0) target = $region41
    $region40: #{mega_sentence_encoder_layer.1} parent=1 // pred_region
      %1423 = dma.done [#allocation3], 256
    $region41: #{mega_sentence_encoder_layer.1} parent=1 // pred_fallthru
      _
    %1424 = vsyncpa [#allocation3], 1

</llo_original>
